<compile_context>
chip_gen: v5e
topology: v5e:2x2
jax: 0.10.0
libtpu: 0.0.40
codegen_flags: <defaults>
</compile_context>

<pallas_src>
import jax
import jax.numpy as jnp
from jax.experimental import pallas as pl
from jax.experimental.pallas import tpu as pltpu


# ----------------------------------------------------------------------------
# Helpers: block sizing and per-shape VMEM limits.
# ----------------------------------------------------------------------------
def _vmem_limit(block_bytes, scratch_bytes=0):
    """Per-shape VMEM limit: double-buffered blocks + scratch + margin, HW-capped."""
    need = int(1.25 * (2 * block_bytes + scratch_bytes)) + (4 << 20)
    try:
        # ~45 MiB usable on v7x (64 MiB physical), ~90 MiB on v5e/v6e (128 MiB).
        cap = int(0.7 * pltpu.get_tpu_info().vmem_capacity_bytes)
    except Exception:
        cap = 48 << 20  # conservative fallback, safe on v7x
    return min(max(need, 16 << 20), cap)


def _choose_bb(n_img, S, P, vmem_budget_bytes):
    """Largest image block that divides n_img, keeps the output block's
    second-minor dim 8-aligned (bb % 8 == 0 or bb == n_img), fits the VMEM
    budget, and leaves >=2 grid steps so megacore can split the image axis."""
    def live_bytes(bb):
        return (2 * (bb * S * S * 4) * 2        # two f32 input blocks, 2 buffers
                + (2 * bb * P * P * 2) * 2)     # stacked bf16 output block, 2 buffers

    legal = [bb for bb in range(1, n_img + 1)
             if n_img % bb == 0 and (bb % 8 == 0 or bb == n_img)]
    fitting = [bb for bb in legal if live_bytes(bb) <= vmem_budget_bytes]
    multi = [bb for bb in fitting if n_img // bb >= 2]
    if multi:
        return max(multi)
    if fitting:
        return max(fitting)
    return min(legal)


def _choose_tile(dim, target):
    """Largest multiple of 128 that divides `dim` and is <= target, else `dim`."""
    best = None
    t = 128
    while t <= min(dim, target):
        if dim % t == 0:
            best = t
        t += 128
    return best if best is not None else dim


# ----------------------------------------------------------------------------
# Kernel 1: clip(x, -1, 1)  (== clamp((x+1)/2,0,1) -> Normalize(0.5,0.5))
#           then separable adaptive average pooling (S,S) -> (P,P) as two
#           flattened bf16 MXU matmuls (no broadcast of the pool factors).
# Output is a single stacked tensor: row 0 = y_hat images, row 1 = y images,
# so both feature sets flow into kernel 2 as one LHS.
# ----------------------------------------------------------------------------
def _pool_kernel(y_ref, yh_ref, pw_ref, pht_ref, o_ref):
    bb, S, _ = y_ref.shape
    P = pw_ref.shape[1]
    pw = pw_ref[...]      # (S, P) bf16 : pool along W
    pht = pht_ref[...]    # (S, P) bf16 : transposed pool-along-H factor (ph.T)

    def preprocess_pool(x):
        # clamp((x+1)*0.5, 0, 1) followed by Normalize(0.5, 0.5) == clip(x, -1, 1)
        # (clip kept in f32; only the matmul inputs are bf16 -> v5e-safe).
        t = jnp.clip(x, -1.0, 1.0).astype(jnp.bfloat16)                  # (bb,S,S)
        # W-pool: one tall 2-D MXU matmul, M = bb*S.
        a = jnp.dot(t.reshape(bb * S, S), pw,
                    preferred_element_type=jnp.float32)                   # (bb*S, P)
        # H-pool: minor-dim transpose (XLU slot), second flattened MXU matmul.
        a = jnp.swapaxes(a.reshape(bb, S, P), 1, 2)                       # (bb,P,S) f32
        c = jnp.dot(a.reshape(bb * P, S).astype(jnp.bfloat16), pht,
                    preferred_element_type=jnp.float32)                   # (bb*P, P) [b,p,q]
        c = jnp.swapaxes(c.reshape(bb, P, P), 1, 2)                       # (bb,P,P) [b,q,p]
        return c.astype(jnp.bfloat16)

    o_ref[0] = preprocess_pool(yh_ref[...])   # stacked rows [0, n_img)     : y_hat
    o_ref[1] = preprocess_pool(y_ref[...])    # stacked rows [n_img, 2n_img): y


# ----------------------------------------------------------------------------
# Kernel 2: synthetic "facenet" linear head, tiled over (E "parallel", K "arbitrary").
#   z[:, e-block] = feats(2N, F) @ W(F, E)[ :, e-block] + b[e-block]
# bf16 inputs, f32 accumulation directly in the resident output block.
# ----------------------------------------------------------------------------
def _embed_kernel(f_ref, w_ref, b_ref, z_ref):
    k = pl.program_id(1)

    @pl.when(k == 0)
    def _init():
        z_ref[...] = jnp.zeros_like(z_ref)

    z_ref[...] += jnp.dot(f_ref[...], w_ref[...],
                          preferred_element_type=jnp.float32)

    @pl.when(k == pl.num_programs(1) - 1)
    def _finalize():
        z_ref[...] += b_ref[...]            # (1, te) broadcast over (2N, te)


# ----------------------------------------------------------------------------
# Kernel 3 (tiny epilogue): L2-normalize embeddings, per-pair dot, mean loss.
#   loss = mean_i (1 - dot(e_yhat[i], e_y[i]))   -> lane-dense (1,128) store
# ----------------------------------------------------------------------------
def _loss_kernel(z_ref, o_ref):
    n = z_ref.shape[0] // 2
    z = z_ref[...]
    zn = z * jax.lax.rsqrt(jnp.sum(z * z, axis=-1, keepdims=True) + 1e-12)
    dots = jnp.sum(zn[:n] * zn[n:], axis=-1, keepdims=True)        # (n, 1)
    loss = jnp.sum(1.0 - dots, axis=0, keepdims=True) / n          # (1, 1)
    o_ref[...] = jnp.broadcast_to(loss, (1, 128))                  # lane-dense store


# ----------------------------------------------------------------------------
# Pool-factor construction and the fused forward.
# ----------------------------------------------------------------------------
def make_pool_matrices(S, P):
    """Separable adaptive-average-pool factors; exact when S = r * P."""
    # TODO(synk): the real IDLoss path (crop 256->188, AdaptiveAvgPool2d(112)) has
    # non-divisible bins; those are still a dense (S,P)/(P,S) factor pair, just
    # not via this arange//r construction.
    r = S // P
    assert S == r * P, "AdaptiveAvgPool2d with non-divisible sizes not supported here"
    hit = (jnp.arange(S) // r)[:, None] == jnp.arange(P)[None, :]
    pw = hit.astype(jnp.float32) / r          # (S, P): pool along W
    return pw, pw.T                           # ph = (P, S): pool along H


def id_loss_forward(y_hat, y, pw, ph, w_emb_bf16, b_emb, *,
                    tk_target=4096, te_target=None, bb_budget_bytes=24 << 20):
    N, C, S, _ = y.shape
    P = pw.shape[1]
    F = C * P * P
    E = w_emb_bf16.shape[1]
    n_img = N * C

    y_img = y.reshape(n_img, S, S)            # leading-dim merge: free XLA reshape
    yh_img = y_hat.reshape(n_img, S, S)
    pw_bf = pw.astype(jnp.bfloat16)
    pht_bf = ph.T.astype(jnp.bfloat16)

    # ---- Kernel 1: preprocess + separable pool (image axis "parallel") ----
    bb = _choose_bb(n_img, S, P, bb_budget_bytes)
    k1_block_bytes = 2 * bb * S * S * 4 + 2 * bb * P * P * 2 + 2 * S * P * 2
    pooled = pl.pallas_call(
        _pool_kernel,
        out_shape=jax.ShapeDtypeStruct((2, n_img, P, P), jnp.bfloat16),
        grid=(n_img // bb,),
        in_specs=[
            pl.BlockSpec((bb, S, S), lambda i: (i, 0, 0)),
            pl.BlockSpec((bb, S, S), lambda i: (i, 0, 0)),
            pl.BlockSpec((S, P), lambda i: (0, 0)),      # constant block
            pl.BlockSpec((S, P), lambda i: (0, 0)),
        ],
        out_specs=pl.BlockSpec((2, bb, P, P), lambda i: (0, i, 0, 0)),
        compiler_params=pltpu.CompilerParams(
            dimension_semantics=("parallel",),
            vmem_limit_bytes=_vmem_limit(k1_block_bytes)),
    )(y_img, yh_img, pw_bf, pht_bf)

    # (2, N*C, P, P) -> (2N, F): flat element order unchanged -> free reshape.
    # .detach() on the y half is a no-op in this forward-only computation.
    feats = pooled.reshape(2 * N, F)

    # ---- Kernel 2: embedding matmul, grid = (E "parallel", K "arbitrary") ----
    tk = _choose_tile(F, tk_target)
    te = E if te_target is None else _choose_tile(E, te_target)
    ne, nk = E // te, F // tk
    k2_block_bytes = 2 * N * tk * 2 + tk * te * 2 + te * 4 + 2 * N * te * 4
    z = pl.pallas_call(
        _embed_kernel,
        out_shape=jax.ShapeDtypeStruct((2 * N, E), jnp.float32),
        grid=(ne, nk),
        in_specs=[
            pl.BlockSpec((2 * N, tk), lambda e, k: (0, k)),
            # If profiling shows exposed weight DMA: pipeline_mode=pl.Buffered(3).
            pl.BlockSpec((tk, te), lambda e, k: (k, e)),
            pl.BlockSpec((1, te), lambda e, k: (0, e)),
        ],
        out_specs=pl.BlockSpec((2 * N, te), lambda e, k: (0, e)),
        compiler_params=pltpu.CompilerParams(
            dimension_semantics=("parallel", "arbitrary"),
            vmem_limit_bytes=_vmem_limit(k2_block_bytes)),
    )(feats, w_emb_bf16, b_emb)

    # ---- Kernel 3: tiny L2-norm + per-pair dot + mean loss epilogue ----
    out = pl.pallas_call(
        _loss_kernel,
        out_shape=jax.ShapeDtypeStruct((1, 128), jnp.float32),
        grid=(1,),
        in_specs=[pl.BlockSpec((2 * N, E), lambda i: (0, 0))],
        out_specs=pl.BlockSpec((1, 128), lambda i: (0, 0)),
        compiler_params=pltpu.CompilerParams(
            vmem_limit_bytes=_vmem_limit(2 * N * E * 4 + 128 * 4)),
    )(z)
    return out[0, 0]


# ----------------------------------------------------------------------------
# Pure-JAX reference (original unsimplified preprocess, f32 pooling).
# ----------------------------------------------------------------------------
def reference(y_hat, y, pw, ph, w_emb_bf16, b_emb, P):
    N, C, S, _ = y.shape

    def feats(x):
        t = jnp.clip((x + 1.0) * 0.5, 0.0, 1.0)
        t = (t - 0.5) / 0.5
        tw = jnp.einsum('nchw,wp->nchp', t, pw)
        tp = jnp.einsum('qh,nchp->ncqp', ph, tw)
        f = tp.reshape(N, C * P * P).astype(jnp.bfloat16)
        z = jnp.dot(f, w_emb_bf16, preferred_element_type=jnp.float32) + b_emb
        return z * jax.lax.rsqrt(jnp.sum(z * z, axis=-1, keepdims=True) + 1e-12)

    dots = jnp.sum(feats(y_hat) * feats(y), axis=-1)
    return jnp.mean(1.0 - dots)


if __name__ == "__main__":
    # Real module: RGB images pooled to 112x112, IR-SE50 -> 512-d embeddings.
    # Toy stand-in: N=8 RGB 32x32 images pooled 32->16, 256-d synthetic head.
    # tk_target/te_target are deliberately small here so the kernel-2 grid
    # exercises multi-step K accumulation (nk=2) and a multi-block parallel E
    # axis (ne=2); production values per the perf review are tk_target=4096..8192
    # and te_target=None (v5e/v6e) or E//2 (v7x).
    N, C, S, P, E = 8, 3, 32, 16, 256
    F = C * P * P

    key = jax.random.PRNGKey(0)
    k_yh, k_y, k_w, k_b = jax.random.split(key, 4)

    y_hat = jax.random.uniform(k_yh, (N, C, S, S), jnp.float32, -1.2, 1.2)
    y = jax.random.uniform(k_y, (N, C, S, S), jnp.float32, -1.2, 1.2)

    pw, ph = make_pool_matrices(S, P)
    w_emb = (0.05 * jax.random.normal(k_w, (F, E), jnp.float32)).astype(jnp.bfloat16)
    b_emb = 0.01 * jax.random.normal(k_b, (1, E), jnp.float32)

    loss = jax.block_until_ready(
        id_loss_forward(y_hat, y, pw, ph, w_emb, b_emb,
                        tk_target=384, te_target=128))
    ref = reference(y_hat, y, pw, ph, w_emb, b_emb, P)

    assert jnp.isfinite(loss), "loss is not finite"
    assert abs(float(loss) - float(ref)) < 1e-2, (float(loss), float(ref))
    print("KERNEL_OK")
</pallas_src>

<mosaic_0001>
module attributes {stable_mosaic.version = 11 : i64} {
  func.func @_pool_kernel(%arg0: i32, %arg1: memref<8x32x32xf32, #tpu.memory_space<vmem>>, %arg2: memref<8x32x32xf32, #tpu.memory_space<vmem>>, %arg3: memref<32x16xbf16, #tpu.memory_space<vmem>>, %arg4: memref<32x16xbf16, #tpu.memory_space<vmem>>, %arg5: memref<2x8x16x16xbf16, #tpu.memory_space<vmem>>) attributes {dimension_semantics = [#tpu.dimension_semantics<parallel>], iteration_bounds = array<i64: 3>, scalar_prefetch = 0 : i64, scratch_operands = 0 : i64, tpu.core_type = #tpu.core_type<tc>, window_params = [{transform_indices = @transform_0, window_bounds = array<i64: 8, 32, 32>}, {transform_indices = @transform_1, window_bounds = array<i64: 8, 32, 32>}, {pipeline_mode = #tpu.pipeline_mode<synchronous>, transform_indices = @transform_2, window_bounds = array<i64: 32, 16>}, {pipeline_mode = #tpu.pipeline_mode<synchronous>, transform_indices = @transform_3, window_bounds = array<i64: 32, 16>}, {transform_indices = @transform_4, window_bounds = array<i64: 2, 8, 16, 16>}]} {
    %c0 = arith.constant 0 : index
    %c0_0 = arith.constant 0 : index
    %0 = vector.load %arg3[%c0, %c0_0] : memref<32x16xbf16, #tpu.memory_space<vmem>>, vector<32x16xbf16>
    %c0_1 = arith.constant 0 : index
    %c0_2 = arith.constant 0 : index
    %1 = vector.load %arg4[%c0_1, %c0_2] : memref<32x16xbf16, #tpu.memory_space<vmem>>, vector<32x16xbf16>
    %c0_3 = arith.constant 0 : index
    %c0_4 = arith.constant 0 : index
    %c0_5 = arith.constant 0 : index
    %2 = vector.load %arg2[%c0_3, %c0_4, %c0_5] : memref<8x32x32xf32, #tpu.memory_space<vmem>>, vector<8x32x32xf32>
    %cst = arith.constant -1.000000e+00 : f32
    %cst_6 = arith.constant 1.000000e+00 : f32
    %3 = vector.broadcast %cst : f32 to vector<8x32x32xf32>
    %4 = arith.maximumf %3, %2 : vector<8x32x32xf32>
    %5 = vector.broadcast %cst_6 : f32 to vector<8x32x32xf32>
    %6 = arith.minimumf %5, %4 : vector<8x32x32xf32>
    %7 = arith.truncf %6 : vector<8x32x32xf32> to vector<8x32x32xbf16>
    %8 = vector.shape_cast %7 : vector<8x32x32xbf16> to vector<256x32xbf16>
    %cst_7 = arith.constant dense<0.000000e+00> : vector<256x16xf32>
    %9 = tpu.matmul %8, %0, %cst_7 {dimension_numbers = #tpu.dot_dimension_numbers<[1], [0], [0], [1], [0, 0, 1, 1], [], []>} : vector<256x32xbf16>, vector<32x16xbf16>, vector<256x16xf32> -> vector<256x16xf32>
    %10 = vector.shape_cast %9 : vector<256x16xf32> to vector<8x32x16xf32>
    %11 = tpu.transpose %10, [0, 2, 1] : vector<8x32x16xf32> -> vector<8x16x32xf32>
    %12 = vector.shape_cast %11 : vector<8x16x32xf32> to vector<128x32xf32>
    %13 = arith.truncf %12 : vector<128x32xf32> to vector<128x32xbf16>
    %cst_8 = arith.constant dense<0.000000e+00> : vector<128x16xf32>
    %14 = tpu.matmul %13, %1, %cst_8 {dimension_numbers = #tpu.dot_dimension_numbers<[1], [0], [0], [1], [0, 0, 1, 1], [], []>} : vector<128x32xbf16>, vector<32x16xbf16>, vector<128x16xf32> -> vector<128x16xf32>
    %15 = vector.shape_cast %14 : vector<128x16xf32> to vector<8x16x16xf32>
    %16 = tpu.transpose %15, [0, 2, 1] : vector<8x16x16xf32> -> vector<8x16x16xf32>
    %17 = arith.truncf %16 : vector<8x16x16xf32> to vector<8x16x16xbf16>
    %c0_9 = arith.constant 0 : index
    %c0_10 = arith.constant 0 : index
    %c0_11 = arith.constant 0 : index
    %c0_12 = arith.constant 0 : index
    %18 = vector.load %arg5[%c0_9, %c0_10, %c0_11, %c0_12] : memref<2x8x16x16xbf16, #tpu.memory_space<vmem>>, vector<1x8x16x16xbf16>
    %19 = vector.shape_cast %18 : vector<1x8x16x16xbf16> to vector<8x16x16xbf16>
    %20 = vector.shape_cast %17 : vector<8x16x16xbf16> to vector<1x8x16x16xbf16>
    tpu.vector_store %arg5[%c0_9, %c0_10, %c0_11, %c0_12], %20 {strides = array<i32>} : memref<2x8x16x16xbf16, #tpu.memory_space<vmem>>, vector<1x8x16x16xbf16>,
    %c0_13 = arith.constant 0 : index
    %c0_14 = arith.constant 0 : index
    %c0_15 = arith.constant 0 : index
    %21 = vector.load %arg1[%c0_13, %c0_14, %c0_15] : memref<8x32x32xf32, #tpu.memory_space<vmem>>, vector<8x32x32xf32>
    %cst_16 = arith.constant -1.000000e+00 : f32
    %cst_17 = arith.constant 1.000000e+00 : f32
    %22 = vector.broadcast %cst_16 : f32 to vector<8x32x32xf32>
    %23 = arith.maximumf %22, %21 : vector<8x32x32xf32>
    %24 = vector.broadcast %cst_17 : f32 to vector<8x32x32xf32>
    %25 = arith.minimumf %24, %23 : vector<8x32x32xf32>
    %26 = arith.truncf %25 : vector<8x32x32xf32> to vector<8x32x32xbf16>
    %27 = vector.shape_cast %26 : vector<8x32x32xbf16> to vector<256x32xbf16>
    %cst_18 = arith.constant dense<0.000000e+00> : vector<256x16xf32>
    %28 = tpu.matmul %27, %0, %cst_18 {dimension_numbers = #tpu.dot_dimension_numbers<[1], [0], [0], [1], [0, 0, 1, 1], [], []>} : vector<256x32xbf16>, vector<32x16xbf16>, vector<256x16xf32> -> vector<256x16xf32>
    %29 = vector.shape_cast %28 : vector<256x16xf32> to vector<8x32x16xf32>
    %30 = tpu.transpose %29, [0, 2, 1] : vector<8x32x16xf32> -> vector<8x16x32xf32>
    %31 = vector.shape_cast %30 : vector<8x16x32xf32> to vector<128x32xf32>
    %32 = arith.truncf %31 : vector<128x32xf32> to vector<128x32xbf16>
    %cst_19 = arith.constant dense<0.000000e+00> : vector<128x16xf32>
    %33 = tpu.matmul %32, %1, %cst_19 {dimension_numbers = #tpu.dot_dimension_numbers<[1], [0], [0], [1], [0, 0, 1, 1], [], []>} : vector<128x32xbf16>, vector<32x16xbf16>, vector<128x16xf32> -> vector<128x16xf32>
    %34 = vector.shape_cast %33 : vector<128x16xf32> to vector<8x16x16xf32>
    %35 = tpu.transpose %34, [0, 2, 1] : vector<8x16x16xf32> -> vector<8x16x16xf32>
    %36 = arith.truncf %35 : vector<8x16x16xf32> to vector<8x16x16xbf16>
    %c1 = arith.constant 1 : index
    %c0_20 = arith.constant 0 : index
    %c0_21 = arith.constant 0 : index
    %c0_22 = arith.constant 0 : index
    %37 = vector.load %arg5[%c1, %c0_20, %c0_21, %c0_22] : memref<2x8x16x16xbf16, #tpu.memory_space<vmem>>, vector<1x8x16x16xbf16>
    %38 = vector.shape_cast %37 : vector<1x8x16x16xbf16> to vector<8x16x16xbf16>
    %39 = vector.shape_cast %36 : vector<8x16x16xbf16> to vector<1x8x16x16xbf16>
    tpu.vector_store %arg5[%c1, %c0_20, %c0_21, %c0_22], %39 {strides = array<i32>} : memref<2x8x16x16xbf16, #tpu.memory_space<vmem>>, vector<1x8x16x16xbf16>,
    return
  }
  func.func @transform_0(%arg0: i32) -> (i32, i32, i32) {
    %c0_i32 = arith.constant 0 : i32
    %c0_i32_0 = arith.constant 0 : i32
    %c0_i32_1 = arith.constant 0 : i32
    return %arg0, %c0_i32, %c0_i32_0 : i32, i32, i32
  }
  func.func @transform_1(%arg0: i32) -> (i32, i32, i32) {
    %c0_i32 = arith.constant 0 : i32
    %c0_i32_0 = arith.constant 0 : i32
    %c0_i32_1 = arith.constant 0 : i32
    return %arg0, %c0_i32, %c0_i32_0 : i32, i32, i32
  }
  func.func @transform_2(%arg0: i32) -> (i32, i32) {
    %c0_i32 = arith.constant 0 : i32
    %c0_i32_0 = arith.constant 0 : i32
    %c0_i32_1 = arith.constant 0 : i32
    return %c0_i32, %c0_i32_0 : i32, i32
  }
  func.func @transform_3(%arg0: i32) -> (i32, i32) {
    %c0_i32 = arith.constant 0 : i32
    %c0_i32_0 = arith.constant 0 : i32
    %c0_i32_1 = arith.constant 0 : i32
    return %c0_i32, %c0_i32_0 : i32, i32
  }
  func.func @transform_4(%arg0: i32) -> (i32, i32, i32, i32) {
    %c0_i32 = arith.constant 0 : i32
    %c0_i32_0 = arith.constant 0 : i32
    %c0_i32_1 = arith.constant 0 : i32
    %c0_i32_2 = arith.constant 0 : i32
    return %c0_i32, %arg0, %c0_i32_0, %c0_i32_1 : i32, i32, i32, i32
  }
}

</mosaic_0001>

<llo_original>
// kernel: tpu_custom_call.1
$region0: #{tpu_custom_call.1}
  #allocation0 [shape = 'u32[]', space=smem, size = 0x4, offset = 0x4, fixed_abs, tag = 'smem constant byte address 0x4 - core index']
  #allocation1 [shape = 'u32[72,128]{1,0:T(1,128)}', space=vmem, size = 0x9000, scoped, tag = 'internal scratch']
  %s0 = inlined_call_operand.hbm [shape: f32[24,32,32], index: 0, kind: input, shape index: {}]
  %s1 = inlined_call_operand.hbm [shape: f32[24,32,32], index: 1, kind: input, shape index: {}]
  %s2 = inlined_call_operand.vmem [shape: bf16[32,16], index: 2, kind: input, shape index: {}]
  %s3 = inlined_call_operand.vmem [shape: bf16[32,16], index: 3, kind: input, shape index: {}]
  %s4 = inlined_call_operand.vmem [shape: bf16[2,24,16,16], index: 4, kind: output, shape index: {}]
  %s5 = sld [smem:[#allocation0]]
  $region94: #{tpu_custom_call.1} parent=0
    _
  %s7 = ssub.s32 1, %s5
  %s8 = scalar_select 0, %s7, %s5
  $region1: #{tpu_custom_call.1} parent=0
    #allocation2 [shape = 'u8[262144]{0}', space=vmem, size = 0x40000, scoped, tag = 'input window, operand 0']
    #allocation3 [shape = 's32[2]{0}', space=sflag, size = 0x8, scoped, tag = 'scoped memory for tpu_custom_call.1']
    #allocation4 [shape = 'u8[262144]{0}', space=vmem, size = 0x40000, scoped, tag = 'input window, operand 1']
    #allocation5 [shape = 's32[2]{0}', space=sflag, size = 0x8, scoped, tag = 'scoped memory for tpu_custom_call.1']
    #allocation6 [shape = 'u8[131072]{0}', space=vmem, size = 0x20000, scoped, tag = 'output window, operand 0']
    %9 = vsyncpa [#allocation3], 0
    %s10 = scalar_lea.sflag [#allocation3], 1
    %11 = vsyncpa %s10, 0
    %12 = vsyncpa [#allocation5], 0
    %s13 = scalar_lea.sflag [#allocation5], 1
    %14 = vsyncpa %s13, 0
    loop: start=0, step=1, limit=5
    $region2: #{tpu_custom_call.1} parent=1 // loop_pre_header
      _
    $region3: #{tpu_custom_call.1} parent=1 // loop_header
      %s16 = sphi 0, %s20
      %p17 = scmp.ge.s32.totalorder %s16, 5
      %s26 = sphi 0, %s28
      %s29 = sphi 0, %s26
      %s30 = sphi 0, %s29
      %s46 = sphi 0, %s30
      %s52 = sphi 0, %s54
      %s55 = sphi 0, %s52
      %s56 = sphi 0, %s55
      %s72 = sphi 0, %s56
      %s76 = sphi 0, %s76
      %s78 = sphi 0, %s76
      %s79 = sphi 0, %s78
      %s93 = sphi 0, %s79
      %s97 = sphi 0, %s97
      %s99 = sphi 0, %s97
      %s100 = sphi 0, %s99
      %s114 = sphi 0, %s100
      %s120 = sphi 0, %s122
      %s123 = sphi 0, %s120
      %s124 = sphi 0, %s123
      %s140 = sphi 0, %s124
    $region4: #{tpu_custom_call.1} parent=1 // loop_header_branch
      %19 = sbr.rel (%p17) target = $region8
    $region5: #{tpu_custom_call.1} parent=1 // loop_body
      %s21 = ssub.s32 %s16, 1
      %s22 = ssub.s32 %s16, 2
      %s23 = sadd.s32 %s16, 1
      %s24 = ssub.s32 %s16, %s23
      %p25 = scmp.eq.s32.totalorder %s24, 0
      %s27 = sadd.s32 %s26, 1
      %s28 = scalar_select %p25, %s26, %s27
      %p31 = pneg %p25
      %p32 = scmp.eq.s32.totalorder %s16, 2
      %p33 = por %p31, %p32
      %p34 = scmp.ne.s32.totalorder %s26, %s29
      %p35 = scmp.eq.s32.totalorder %s16, 0
      %p36 = por %p34, %p35
      %p37 = scmp.ne.s32.totalorder %s26, %s29
      %p38 = scmp.eq.s32.totalorder %s21, 2
      %p39 = por %p37, %p38
      %p40 = scmp.ne.s32.totalorder %s29, %s30
      %p41 = scmp.eq.s32.totalorder %s21, 0
      %p42 = por %p40, %p41
      %p43 = scmp.ne.s32.totalorder %s29, %s30
      %p44 = scmp.eq.s32.totalorder %s22, 2
      %p45 = por %p43, %p44
      %p47 = scmp.ne.s32.totalorder %s30, %s46
      %p48 = scmp.eq.s32.totalorder %s22, 0
      %p49 = por %p47, %p48
      %s50 = ssub.s32 %s16, %s23
      %p51 = scmp.eq.s32.totalorder %s50, 0
      %s53 = sadd.s32 %s52, 1
      %s54 = scalar_select %p51, %s52, %s53
      %p57 = pneg %p51
      %p58 = scmp.eq.s32.totalorder %s16, 2
      %p59 = por %p57, %p58
      %p60 = scmp.ne.s32.totalorder %s52, %s55
      %p61 = scmp.eq.s32.totalorder %s16, 0
      %p62 = por %p60, %p61
      %p63 = scmp.ne.s32.totalorder %s52, %s55
      %p64 = scmp.eq.s32.totalorder %s21, 2
      %p65 = por %p63, %p64
      %p66 = scmp.ne.s32.totalorder %s55, %s56
      %p67 = scmp.eq.s32.totalorder %s21, 0
      %p68 = por %p66, %p67
      %p69 = scmp.ne.s32.totalorder %s55, %s56
      %p70 = scmp.eq.s32.totalorder %s22, 2
      %p71 = por %p69, %p70
      %p73 = scmp.ne.s32.totalorder %s56, %s72
      %p74 = scmp.eq.s32.totalorder %s22, 0
      %p75 = por %p73, %p74
      %s77 = sadd.s32 %s76, 1
      %p80 = scmp.eq.s32.totalorder %s16, 2
      %p81 = scmp.ne.s32.totalorder %s76, %s78
      %p82 = scmp.eq.s32.totalorder %s16, 0
      %p83 = por %p81, %p82
      %p84 = scmp.ne.s32.totalorder %s76, %s78
      %p85 = scmp.eq.s32.totalorder %s21, 2
      %p86 = por %p84, %p85
      %p87 = scmp.ne.s32.totalorder %s78, %s79
      %p88 = scmp.eq.s32.totalorder %s21, 0
      %p89 = por %p87, %p88
      %p90 = scmp.ne.s32.totalorder %s78, %s79
      %p91 = scmp.eq.s32.totalorder %s22, 2
      %p92 = por %p90, %p91
      %p94 = scmp.ne.s32.totalorder %s79, %s93
      %p95 = scmp.eq.s32.totalorder %s22, 0
      %p96 = por %p94, %p95
      %s98 = sadd.s32 %s97, 1
      %p101 = scmp.eq.s32.totalorder %s16, 2
      %p102 = scmp.ne.s32.totalorder %s97, %s99
      %p103 = scmp.eq.s32.totalorder %s16, 0
      %p104 = por %p102, %p103
      %p105 = scmp.ne.s32.totalorder %s97, %s99
      %p106 = scmp.eq.s32.totalorder %s21, 2
      %p107 = por %p105, %p106
      %p108 = scmp.ne.s32.totalorder %s99, %s100
      %p109 = scmp.eq.s32.totalorder %s21, 0
      %p110 = por %p108, %p109
      %p111 = scmp.ne.s32.totalorder %s99, %s100
      %p112 = scmp.eq.s32.totalorder %s22, 2
      %p113 = por %p111, %p112
      %p115 = scmp.ne.s32.totalorder %s100, %s114
      %p116 = scmp.eq.s32.totalorder %s22, 0
      %p117 = por %p115, %p116
      %s118 = ssub.s32 %s16, %s23
      %p119 = scmp.eq.s32.totalorder %s118, 0
      %s121 = sadd.s32 %s120, 1
      %s122 = scalar_select %p119, %s120, %s121
      %p125 = pneg %p119
      %p126 = scmp.eq.s32.totalorder %s16, 2
      %p127 = por %p125, %p126
      %p128 = scmp.ne.s32.totalorder %s120, %s123
      %p129 = scmp.eq.s32.totalorder %s16, 0
      %p130 = por %p128, %p129
      %p131 = scmp.ne.s32.totalorder %s120, %s123
      %p132 = scmp.eq.s32.totalorder %s21, 2
      %p133 = por %p131, %p132
      %p134 = scmp.ne.s32.totalorder %s123, %s124
      %p135 = scmp.eq.s32.totalorder %s21, 0
      %p136 = por %p134, %p135
      %p137 = scmp.ne.s32.totalorder %s123, %s124
      %p138 = scmp.eq.s32.totalorder %s22, 2
      %p139 = por %p137, %p138
      %p141 = scmp.ne.s32.totalorder %s124, %s140
      %p142 = scmp.eq.s32.totalorder %s22, 0
      %p143 = por %p141, %p142
      %p144 = scmp.le.s32.totalorder 1, %s16
      %p145 = scmp.lt.s32.totalorder %s16, 4
      %p146 = pnand %p144, %p145
      %p147 = pneg %p146
      // Predicated region
      $region9: #{tpu_custom_call.1} parent=5 // pred_check
        _
      $region10: #{tpu_custom_call.1} parent=5 // pred_check_branch
        %149 = sbr.rel (%p146) target = $region12
      $region11: #{tpu_custom_call.1} parent=5 // pred_region
        %s150 = ssub.s32 %s16, 1
        // Predicated region
        $region13: #{tpu_custom_call.1} parent=11 // pred_check
          %p151 = pneg %p89
        $region14: #{tpu_custom_call.1} parent=11 // pred_check_branch
          %153 = sbr.rel (%p151) target = $region16
        $region15: #{tpu_custom_call.1} parent=11 // pred_region
          _
        $region16: #{tpu_custom_call.1} parent=11 // pred_fallthru
          _
        // Predicated region
        $region17: #{tpu_custom_call.1} parent=11 // pred_check
          %p154 = pneg %p110
        $region18: #{tpu_custom_call.1} parent=11 // pred_check_branch
          %156 = sbr.rel (%p154) target = $region20
        $region19: #{tpu_custom_call.1} parent=11 // pred_region
          _
        $region20: #{tpu_custom_call.1} parent=11 // pred_fallthru
          _
      $region12: #{tpu_custom_call.1} parent=5 // pred_fallthru
        _
      %p157 = scmp.lt.s32.totalorder %s16, 3
      // Predicated region
      $region21: #{tpu_custom_call.1} parent=5 // pred_check
        %p158 = pneg %p157
      $region22: #{tpu_custom_call.1} parent=5 // pred_check_branch
        %160 = sbr.rel (%p158) target = $region24
      $region23: #{tpu_custom_call.1} parent=5 // pred_region
        // Predicated region
        $region25: #{tpu_custom_call.1} parent=23 // pred_check
          %p161 = pneg %p36
        $region26: #{tpu_custom_call.1} parent=23 // pred_check_branch
          %163 = sbr.rel (%p161) target = $region28
        $region27: #{tpu_custom_call.1} parent=23 // pred_region
          %s164 = sand.u32 %s26, 1
          %s165 = scalar_lea.sflag [#allocation3], %s164
          %s166 = sand.u32 %s26, 1
          %s167 = smul.addr %s166, 256
          %s168 = scalar_lea.vmem [#allocation2], %s167
          %s169 = smul.u32 8, %s16
          %171 = vsyncadd %s165, 0
          %s172 = smul.addr %s169, 4
          %s173 = smul.addr %s172, 8
          %s174 = scalar_lea.hbm %s0, %s173
          %s175 = sshll.u32 %s174, 4
          %s176 = int_to_ptr.hbm [resolvable:$true] %s175
          %s177 = sshll.u32 %s168, 4
          %s178 = int_to_ptr.vmem [resolvable:$true] %s177
          %183 = dma.hbm_to_vmem [thread:$0]  %s176, 4096, %s178, %s165, 128, 128, 8
        $region28: #{tpu_custom_call.1} parent=23 // pred_fallthru
          _
        // Predicated region
        $region29: #{tpu_custom_call.1} parent=23 // pred_check
          %p184 = pneg %p62
        $region30: #{tpu_custom_call.1} parent=23 // pred_check_branch
          %186 = sbr.rel (%p184) target = $region32
        $region31: #{tpu_custom_call.1} parent=23 // pred_region
          %s187 = sand.u32 %s52, 1
          %s188 = scalar_lea.sflag [#allocation5], %s187
          %s189 = sand.u32 %s52, 1
          %s190 = smul.addr %s189, 256
          %s191 = scalar_lea.vmem [#allocation4], %s190
          %s192 = smul.u32 8, %s16
          %194 = vsyncadd %s188, 0
          %s195 = smul.addr %s192, 4
          %s196 = smul.addr %s195, 8
          %s197 = scalar_lea.hbm %s1, %s196
          %s198 = sshll.u32 %s197, 4
          %s199 = int_to_ptr.hbm [resolvable:$true] %s198
          %s200 = sshll.u32 %s191, 4
          %s201 = int_to_ptr.vmem [resolvable:$true] %s200
          %206 = dma.hbm_to_vmem [thread:$0]  %s199, 4096, %s201, %s188, 128, 128, 8
        $region32: #{tpu_custom_call.1} parent=23 // pred_fallthru
          _
      $region24: #{tpu_custom_call.1} parent=5 // pred_fallthru
        _
      %p207 = scmp.le.s32.totalorder 1, %s16
      %p208 = scmp.lt.s32.totalorder %s16, 4
      %p209 = pnand %p207, %p208
      %p210 = pneg %p209
      // Predicated region
      $region33: #{tpu_custom_call.1} parent=5 // pred_check
        _
      $region34: #{tpu_custom_call.1} parent=5 // pred_check_branch
        %212 = sbr.rel (%p209) target = $region36
      $region35: #{tpu_custom_call.1} parent=5 // pred_region
        %s213 = ssub.s32 %s16, 1
        %s214 = sand.u32 %s29, 1
        %s215 = scalar_lea.sflag [#allocation3], %s214
        %s216 = sand.u32 %s29, 1
        %s217 = smul.addr %s216, 256
        %s218 = scalar_lea.vmem [#allocation2], %s217
        // Predicated region
        $region37: #{tpu_custom_call.1} parent=35 // pred_check
          %p219 = pneg %p42
        $region38: #{tpu_custom_call.1} parent=35 // pred_check_branch
          %221 = sbr.rel (%p219) target = $region40
        $region39: #{tpu_custom_call.1} parent=35 // pred_region
          %223 = dma.done %s215, 4096
        $region40: #{tpu_custom_call.1} parent=35 // pred_fallthru
          _
        %s224 = sand.u32 %s55, 1
        %s225 = scalar_lea.sflag [#allocation5], %s224
        %s226 = sand.u32 %s55, 1
        %s227 = smul.addr %s226, 256
        %s228 = scalar_lea.vmem [#allocation4], %s227
        // Predicated region
        $region41: #{tpu_custom_call.1} parent=35 // pred_check
          %p229 = pneg %p68
        $region42: #{tpu_custom_call.1} parent=35 // pred_check_branch
          %231 = sbr.rel (%p229) target = $region44
        $region43: #{tpu_custom_call.1} parent=35 // pred_region
          %233 = dma.done %s225, 4096
        $region44: #{tpu_custom_call.1} parent=35 // pred_fallthru
          _
        %s234 = sand.u32 %s29, 1
        %s235 = scalar_lea.sflag [#allocation3], %s234
        %s236 = sand.u32 %s29, 1
        %s237 = smul.addr %s236, 256
        %s238 = scalar_lea.vmem [#allocation2], %s237
        %p239 = pneg %p42
        %p240 = pneg %p39
        %s241 = sand.u32 %s55, 1
        %s242 = scalar_lea.sflag [#allocation5], %s241
        %s243 = sand.u32 %s55, 1
        %s244 = smul.addr %s243, 256
        %s245 = scalar_lea.vmem [#allocation4], %s244
        %p246 = pneg %p68
        %p247 = pneg %p65
        %p248 = pneg %p89
        %p249 = pneg %p86
        %p250 = pneg %p110
        %p251 = pneg %p107
        %p252 = pneg %p136
        %p253 = pneg %p133
        %s254 = sand.u32 %s123, 1
        %s255 = sand.u32 %s123, 1
        %s256 = smul.addr %s255, 128
        %s257 = scalar_lea.vmem [#allocation6], %s256
        %s258 = smul.u32 8, %s21
        %s259 = smul.u32 8, %s21
        %s260 = smul.u32 8, %s21
        %v262 = vld [vmem:[%s2] sm:$0xf]
        %v263 = vld [vmem:[%s2 + $0x4] sm:$0xf]
        %v264 = vld [vmem:[%s2 + $0x8] sm:$0xf]
        %v265 = vld [vmem:[%s2 + $0xc] sm:$0xf]
        %v266 = vld [vmem:[%s3] sm:$0xf]
        %v267 = vld [vmem:[%s3 + $0x4] sm:$0xf]
        %v268 = vld [vmem:[%s3 + $0x8] sm:$0xf]
        %v269 = vld [vmem:[%s3 + $0xc] sm:$0xf]
        %v270 = vld [vmem:[%s228] sm:$0xff]
        %v271 = vld [vmem:[%s228 + $0x8] sm:$0xff]
        %v272 = vld [vmem:[%s228 + $0x10] sm:$0xff]
        %v273 = vld [vmem:[%s228 + $0x18] sm:$0xff]
        %v274 = vld [vmem:[%s228 + $0x20] sm:$0xff]
        %v275 = vld [vmem:[%s228 + $0x28] sm:$0xff]
        %v276 = vld [vmem:[%s228 + $0x30] sm:$0xff]
        %v277 = vld [vmem:[%s228 + $0x38] sm:$0xff]
        %v278 = vld [vmem:[%s228 + $0x40] sm:$0xff]
        %v279 = vld [vmem:[%s228 + $0x48] sm:$0xff]
        %v280 = vld [vmem:[%s228 + $0x50] sm:$0xff]
        %v281 = vld [vmem:[%s228 + $0x58] sm:$0xff]
        %v282 = vld [vmem:[%s228 + $0x60] sm:$0xff]
        %v283 = vld [vmem:[%s228 + $0x68] sm:$0xff]
        %v284 = vld [vmem:[%s228 + $0x70] sm:$0xff]
        %v285 = vld [vmem:[%s228 + $0x78] sm:$0xff]
        %v286 = vld [vmem:[%s228 + $0x80] sm:$0xff]
        %v287 = vld [vmem:[%s228 + $0x88] sm:$0xff]
        %v288 = vld [vmem:[%s228 + $0x90] sm:$0xff]
        %v289 = vld [vmem:[%s228 + $0x98] sm:$0xff]
        %v290 = vld [vmem:[%s228 + $0xa0] sm:$0xff]
        %v291 = vld [vmem:[%s228 + $0xa8] sm:$0xff]
        %v292 = vld [vmem:[%s228 + $0xb0] sm:$0xff]
        %v293 = vld [vmem:[%s228 + $0xb8] sm:$0xff]
        %v294 = vld [vmem:[%s228 + $0xc0] sm:$0xff]
        %v295 = vld [vmem:[%s228 + $0xc8] sm:$0xff]
        %v296 = vld [vmem:[%s228 + $0xd0] sm:$0xff]
        %v297 = vld [vmem:[%s228 + $0xd8] sm:$0xff]
        %v298 = vld [vmem:[%s228 + $0xe0] sm:$0xff]
        %v299 = vld [vmem:[%s228 + $0xe8] sm:$0xff]
        %v300 = vld [vmem:[%s228 + $0xf0] sm:$0xff]
        %v301 = vld [vmem:[%s228 + $0xf8] sm:$0xff]
        %v302 = vmax.f32 %v270, -1.0
        %v303 = vmax.f32 %v271, -1.0
        %v304 = vmax.f32 %v272, -1.0
        %v305 = vmax.f32 %v273, -1.0
        %v306 = vmax.f32 %v274, -1.0
        %v307 = vmax.f32 %v275, -1.0
        %v308 = vmax.f32 %v276, -1.0
        %v309 = vmax.f32 %v277, -1.0
        %v310 = vmax.f32 %v278, -1.0
        %v311 = vmax.f32 %v279, -1.0
        %v312 = vmax.f32 %v280, -1.0
        %v313 = vmax.f32 %v281, -1.0
        %v314 = vmax.f32 %v282, -1.0
        %v315 = vmax.f32 %v283, -1.0
        %v316 = vmax.f32 %v284, -1.0
        %v317 = vmax.f32 %v285, -1.0
        %v318 = vmax.f32 %v286, -1.0
        %v319 = vmax.f32 %v287, -1.0
        %v320 = vmax.f32 %v288, -1.0
        %v321 = vmax.f32 %v289, -1.0
        %v322 = vmax.f32 %v290, -1.0
        %v323 = vmax.f32 %v291, -1.0
        %v324 = vmax.f32 %v292, -1.0
        %v325 = vmax.f32 %v293, -1.0
        %v326 = vmax.f32 %v294, -1.0
        %v327 = vmax.f32 %v295, -1.0
        %v328 = vmax.f32 %v296, -1.0
        %v329 = vmax.f32 %v297, -1.0
        %v330 = vmax.f32 %v298, -1.0
        %v331 = vmax.f32 %v299, -1.0
        %v332 = vmax.f32 %v300, -1.0
        %v333 = vmax.f32 %v301, -1.0
        %v334 = vmin.f32 %v302, 1.0
        %v335 = vmin.f32 %v303, 1.0
        %v336 = vmin.f32 %v304, 1.0
        %v337 = vmin.f32 %v305, 1.0
        %v338 = vmin.f32 %v306, 1.0
        %v339 = vmin.f32 %v307, 1.0
        %v340 = vmin.f32 %v308, 1.0
        %v341 = vmin.f32 %v309, 1.0
        %v342 = vmin.f32 %v310, 1.0
        %v343 = vmin.f32 %v311, 1.0
        %v344 = vmin.f32 %v312, 1.0
        %v345 = vmin.f32 %v313, 1.0
        %v346 = vmin.f32 %v314, 1.0
        %v347 = vmin.f32 %v315, 1.0
        %v348 = vmin.f32 %v316, 1.0
        %v349 = vmin.f32 %v317, 1.0
        %v350 = vmin.f32 %v318, 1.0
        %v351 = vmin.f32 %v319, 1.0
        %v352 = vmin.f32 %v320, 1.0
        %v353 = vmin.f32 %v321, 1.0
        %v354 = vmin.f32 %v322, 1.0
        %v355 = vmin.f32 %v323, 1.0
        %v356 = vmin.f32 %v324, 1.0
        %v357 = vmin.f32 %v325, 1.0
        %v358 = vmin.f32 %v326, 1.0
        %v359 = vmin.f32 %v327, 1.0
        %v360 = vmin.f32 %v328, 1.0
        %v361 = vmin.f32 %v329, 1.0
        %v362 = vmin.f32 %v330, 1.0
        %v363 = vmin.f32 %v331, 1.0
        %v364 = vmin.f32 %v332, 1.0
        %v365 = vmin.f32 %v333, 1.0
        %v366 = vpack.c.bf16 %v334, %v334
        %v367 = vpack.c.bf16 %v335, %v335
        %v368 = vpack.c.bf16 %v336, %v336
        %v369 = vpack.c.bf16 %v337, %v337
        %v370 = vpack.c.bf16 %v338, %v338
        %v371 = vpack.c.bf16 %v339, %v339
        %v372 = vpack.c.bf16 %v340, %v340
        %v373 = vpack.c.bf16 %v341, %v341
        %v374 = vpack.c.bf16 %v342, %v342
        %v375 = vpack.c.bf16 %v343, %v343
        %v376 = vpack.c.bf16 %v344, %v344
        %v377 = vpack.c.bf16 %v345, %v345
        %v378 = vpack.c.bf16 %v346, %v346
        %v379 = vpack.c.bf16 %v347, %v347
        %v380 = vpack.c.bf16 %v348, %v348
        %v381 = vpack.c.bf16 %v349, %v349
        %v382 = vpack.c.bf16 %v350, %v350
        %v383 = vpack.c.bf16 %v351, %v351
        %v384 = vpack.c.bf16 %v352, %v352
        %v385 = vpack.c.bf16 %v353, %v353
        %v386 = vpack.c.bf16 %v354, %v354
        %v387 = vpack.c.bf16 %v355, %v355
        %v388 = vpack.c.bf16 %v356, %v356
        %v389 = vpack.c.bf16 %v357, %v357
        %v390 = vpack.c.bf16 %v358, %v358
        %v391 = vpack.c.bf16 %v359, %v359
        %v392 = vpack.c.bf16 %v360, %v360
        %v393 = vpack.c.bf16 %v361, %v361
        %v394 = vpack.c.bf16 %v362, %v362
        %v395 = vpack.c.bf16 %v363, %v363
        %v396 = vpack.c.bf16 %v364, %v364
        %v397 = vpack.c.bf16 %v365, %v365
        %v430 = vunpack.c.l.b16 %v366
        %v431 = vunpack.c.l.b16 %v367
        %v432 = vunpack.c.l.b16 %v368
        %v433 = vunpack.c.l.b16 %v369
        %v434 = vunpack.c.l.b16 %v370
        %v435 = vunpack.c.l.b16 %v371
        %v436 = vunpack.c.l.b16 %v372
        %v437 = vunpack.c.l.b16 %v373
        %v438 = vunpack.c.l.b16 %v374
        %v439 = vunpack.c.l.b16 %v375
        %v440 = vunpack.c.l.b16 %v376
        %v441 = vunpack.c.l.b16 %v377
        %v442 = vunpack.c.l.b16 %v378
        %v443 = vunpack.c.l.b16 %v379
        %v444 = vunpack.c.l.b16 %v380
        %v445 = vunpack.c.l.b16 %v381
        %v446 = vunpack.c.l.b16 %v382
        %v447 = vunpack.c.l.b16 %v383
        %v448 = vunpack.c.l.b16 %v384
        %v449 = vunpack.c.l.b16 %v385
        %v450 = vunpack.c.l.b16 %v386
        %v451 = vunpack.c.l.b16 %v387
        %v452 = vunpack.c.l.b16 %v388
        %v453 = vunpack.c.l.b16 %v389
        %v454 = vunpack.c.l.b16 %v390
        %v455 = vunpack.c.l.b16 %v391
        %v456 = vunpack.c.l.b16 %v392
        %v457 = vunpack.c.l.b16 %v393
        %v458 = vunpack.c.l.b16 %v394
        %v459 = vunpack.c.l.b16 %v395
        %v460 = vunpack.c.l.b16 %v396
        %v461 = vunpack.c.l.b16 %v397
        %v462 = vpack.c.b16 %v431, %v430
        %v463 = vpack.c.b16 %v433, %v432
        %v464 = vpack.c.b16 %v435, %v434
        %v465 = vpack.c.b16 %v437, %v436
        %v466 = vpack.c.b16 %v439, %v438
        %v467 = vpack.c.b16 %v441, %v440
        %v468 = vpack.c.b16 %v443, %v442
        %v469 = vpack.c.b16 %v445, %v444
        %v470 = vpack.c.b16 %v447, %v446
        %v471 = vpack.c.b16 %v449, %v448
        %v472 = vpack.c.b16 %v451, %v450
        %v473 = vpack.c.b16 %v453, %v452
        %v474 = vpack.c.b16 %v455, %v454
        %v475 = vpack.c.b16 %v457, %v456
        %v476 = vpack.c.b16 %v459, %v458
        %v477 = vpack.c.b16 %v461, %v460
        %v482 = vunpack.c.l.b16 %v262
        %v483 = vunpack.c.l.b16 %v263
        %v484 = vunpack.c.l.b16 %v264
        %v485 = vunpack.c.l.b16 %v265
        %v486 = vpack.c.b16 %v483, %v482
        %v487 = vpack.c.b16 %v485, %v484
        %vm490 = vcmask 261120
        %v492 = vsel %vm490, %v462, 0
        %v495 = vsel %vm490, %v463, 0
        %v498 = vsel %vm490, %v464, 0
        %v501 = vsel %vm490, %v465, 0
        %v504 = vsel %vm490, %v466, 0
        %v507 = vsel %vm490, %v467, 0
        %v510 = vsel %vm490, %v468, 0
        %v513 = vsel %vm490, %v469, 0
        %v516 = vsel %vm490, %v470, 0
        %v519 = vsel %vm490, %v471, 0
        %v522 = vsel %vm490, %v472, 0
        %v525 = vsel %vm490, %v473, 0
        %v528 = vsel %vm490, %v474, 0
        %v531 = vsel %vm490, %v475, 0
        %v534 = vsel %vm490, %v476, 0
        %v537 = vsel %vm490, %v477, 0
        %539 = vmatpush.bf16.msra.mxu0 0
        %540 = vmatpush.bf16.msra.mxu0 0
        %541 = vmatpush.bf16.msra.mxu0 0
        %542 = vmatpush.bf16.msra.mxu0 0
        %543 = vmatpush.bf16.msra.mxu0 0
        %544 = vmatpush.bf16.msra.mxu0 0
        %545 = vmatpush.bf16.msra.mxu0 %v487
        %546 = vmatpush.bf16.msra.mxu0 %v486
        %547 = vmatmul.bf16.gmra.mxu0 %v492
        %v548 = vpop.f32.mrf.mxu0
        %v549 = vadd.f32 0.0, %v548
        %v550 = vpop.f32.mrf.mxu0
        %v551 = vadd.f32 0.0, %v550
        %552 = vmatmul.bf16.gmra.mxu0 %v495
        %v553 = vpop.f32.mrf.mxu0
        %v554 = vadd.f32 0.0, %v553
        %v555 = vpop.f32.mrf.mxu0
        %v556 = vadd.f32 0.0, %v555
        %557 = vmatmul.bf16.gmra.mxu0 %v498
        %v558 = vpop.f32.mrf.mxu0
        %v559 = vadd.f32 0.0, %v558
        %v560 = vpop.f32.mrf.mxu0
        %v561 = vadd.f32 0.0, %v560
        %562 = vmatmul.bf16.gmra.mxu0 %v501
        %v563 = vpop.f32.mrf.mxu0
        %v564 = vadd.f32 0.0, %v563
        %v565 = vpop.f32.mrf.mxu0
        %v566 = vadd.f32 0.0, %v565
        %567 = vmatmul.bf16.gmra.mxu0 %v504
        %v568 = vpop.f32.mrf.mxu0
        %v569 = vadd.f32 0.0, %v568
        %v570 = vpop.f32.mrf.mxu0
        %v571 = vadd.f32 0.0, %v570
        %572 = vmatmul.bf16.gmra.mxu0 %v507
        %v573 = vpop.f32.mrf.mxu0
        %v574 = vadd.f32 0.0, %v573
        %v575 = vpop.f32.mrf.mxu0
        %v576 = vadd.f32 0.0, %v575
        %577 = vmatmul.bf16.gmra.mxu0 %v510
        %v578 = vpop.f32.mrf.mxu0
        %v579 = vadd.f32 0.0, %v578
        %v580 = vpop.f32.mrf.mxu0
        %v581 = vadd.f32 0.0, %v580
        %582 = vmatmul.bf16.gmra.mxu0 %v513
        %v583 = vpop.f32.mrf.mxu0
        %v584 = vadd.f32 0.0, %v583
        %v585 = vpop.f32.mrf.mxu0
        %v586 = vadd.f32 0.0, %v585
        %587 = vmatmul.bf16.gmra.mxu0 %v516
        %v588 = vpop.f32.mrf.mxu0
        %v589 = vadd.f32 0.0, %v588
        %v590 = vpop.f32.mrf.mxu0
        %v591 = vadd.f32 0.0, %v590
        %592 = vmatmul.bf16.gmra.mxu0 %v519
        %v593 = vpop.f32.mrf.mxu0
        %v594 = vadd.f32 0.0, %v593
        %v595 = vpop.f32.mrf.mxu0
        %v596 = vadd.f32 0.0, %v595
        %597 = vmatmul.bf16.gmra.mxu0 %v522
        %v598 = vpop.f32.mrf.mxu0
        %v599 = vadd.f32 0.0, %v598
        %v600 = vpop.f32.mrf.mxu0
        %v601 = vadd.f32 0.0, %v600
        %602 = vmatmul.bf16.gmra.mxu0 %v525
        %v603 = vpop.f32.mrf.mxu0
        %v604 = vadd.f32 0.0, %v603
        %v605 = vpop.f32.mrf.mxu0
        %v606 = vadd.f32 0.0, %v605
        %607 = vmatmul.bf16.gmra.mxu0 %v528
        %v608 = vpop.f32.mrf.mxu0
        %v609 = vadd.f32 0.0, %v608
        %v610 = vpop.f32.mrf.mxu0
        %v611 = vadd.f32 0.0, %v610
        %612 = vmatmul.bf16.gmra.mxu0 %v531
        %v613 = vpop.f32.mrf.mxu0
        %v614 = vadd.f32 0.0, %v613
        %v615 = vpop.f32.mrf.mxu0
        %v616 = vadd.f32 0.0, %v615
        %617 = vmatmul.bf16.gmra.mxu0 %v534
        %v618 = vpop.f32.mrf.mxu0
        %v619 = vadd.f32 0.0, %v618
        %v620 = vpop.f32.mrf.mxu0
        %v621 = vadd.f32 0.0, %v620
        %622 = vmatmul.bf16.gmra.mxu0 %v537
        %v623 = vpop.f32.mrf.mxu0
        %v624 = vadd.f32 0.0, %v623
        %v625 = vpop.f32.mrf.mxu0
        %v626 = vadd.f32 0.0, %v625
        %627 = vdwg.mxu0
        %628 = vxpose.xlu0.b32.start [1/16] %v549, 128
        %629 = vxpose.xlu0.b32.cont [2/16] %v551, 128
        %630 = vxpose.xlu0.b32.cont [3/16] %v554, 128
        %631 = vxpose.xlu0.b32.cont [4/16] %v556, 128
        %632 = vxpose.xlu0.b32.cont [5/16] 0.0, 128
        %633 = vxpose.xlu0.b32.cont [6/16] 0.0, 128
        %634 = vxpose.xlu0.b32.cont [7/16] 0.0, 128
        %635 = vxpose.xlu0.b32.cont [8/16] 0.0, 128
        %636 = vxpose.xlu0.b32.cont [9/16] 0.0, 128
        %637 = vxpose.xlu0.b32.cont [10/16] 0.0, 128
        %638 = vxpose.xlu0.b32.cont [11/16] 0.0, 128
        %639 = vxpose.xlu0.b32.cont [12/16] 0.0, 128
        %640 = vxpose.xlu0.b32.cont [13/16] 0.0, 128
        %641 = vxpose.xlu0.b32.cont [14/16] 0.0, 128
        %642 = vxpose.xlu0.b32.cont [15/16] 0.0, 128
        %643 = vxpose.xlu0.b32.end [16/16] 0.0, 128
        %v644 = vpop.trf.xlu0
        %v645 = vpop.trf.xlu0
        %v646 = vpop.trf.xlu0
        %v647 = vpop.trf.xlu0
        %v648 = vpop.trf.xlu0
        %v649 = vpop.trf.xlu0
        %v650 = vpop.trf.xlu0
        %v651 = vpop.trf.xlu0
        %v652 = vpop.trf.xlu0
        %v653 = vpop.trf.xlu0
        %v654 = vpop.trf.xlu0
        %v655 = vpop.trf.xlu0
        %v656 = vpop.trf.xlu0
        %v657 = vpop.trf.xlu0
        %v658 = vpop.trf.xlu0
        %v659 = vpop.trf.xlu0
        %660 = vxpose.xlu0.b32.start [1/16] %v559, 128
        %661 = vxpose.xlu0.b32.cont [2/16] %v561, 128
        %662 = vxpose.xlu0.b32.cont [3/16] %v564, 128
        %663 = vxpose.xlu0.b32.cont [4/16] %v566, 128
        %664 = vxpose.xlu0.b32.cont [5/16] 0.0, 128
        %665 = vxpose.xlu0.b32.cont [6/16] 0.0, 128
        %666 = vxpose.xlu0.b32.cont [7/16] 0.0, 128
        %667 = vxpose.xlu0.b32.cont [8/16] 0.0, 128
        %668 = vxpose.xlu0.b32.cont [9/16] 0.0, 128
        %669 = vxpose.xlu0.b32.cont [10/16] 0.0, 128
        %670 = vxpose.xlu0.b32.cont [11/16] 0.0, 128
        %671 = vxpose.xlu0.b32.cont [12/16] 0.0, 128
        %672 = vxpose.xlu0.b32.cont [13/16] 0.0, 128
        %673 = vxpose.xlu0.b32.cont [14/16] 0.0, 128
        %674 = vxpose.xlu0.b32.cont [15/16] 0.0, 128
        %675 = vxpose.xlu0.b32.end [16/16] 0.0, 128
        %v676 = vpop.trf.xlu0
        %v677 = vpop.trf.xlu0
        %v678 = vpop.trf.xlu0
        %v679 = vpop.trf.xlu0
        %v680 = vpop.trf.xlu0
        %v681 = vpop.trf.xlu0
        %v682 = vpop.trf.xlu0
        %v683 = vpop.trf.xlu0
        %v684 = vpop.trf.xlu0
        %v685 = vpop.trf.xlu0
        %v686 = vpop.trf.xlu0
        %v687 = vpop.trf.xlu0
        %v688 = vpop.trf.xlu0
        %v689 = vpop.trf.xlu0
        %v690 = vpop.trf.xlu0
        %v691 = vpop.trf.xlu0
        %692 = vxpose.xlu0.b32.start [1/16] %v569, 128
        %693 = vxpose.xlu0.b32.cont [2/16] %v571, 128
        %694 = vxpose.xlu0.b32.cont [3/16] %v574, 128
        %695 = vxpose.xlu0.b32.cont [4/16] %v576, 128
        %696 = vxpose.xlu0.b32.cont [5/16] 0.0, 128
        %697 = vxpose.xlu0.b32.cont [6/16] 0.0, 128
        %698 = vxpose.xlu0.b32.cont [7/16] 0.0, 128
        %699 = vxpose.xlu0.b32.cont [8/16] 0.0, 128
        %700 = vxpose.xlu0.b32.cont [9/16] 0.0, 128
        %701 = vxpose.xlu0.b32.cont [10/16] 0.0, 128
        %702 = vxpose.xlu0.b32.cont [11/16] 0.0, 128
        %703 = vxpose.xlu0.b32.cont [12/16] 0.0, 128
        %704 = vxpose.xlu0.b32.cont [13/16] 0.0, 128
        %705 = vxpose.xlu0.b32.cont [14/16] 0.0, 128
        %706 = vxpose.xlu0.b32.cont [15/16] 0.0, 128
        %707 = vxpose.xlu0.b32.end [16/16] 0.0, 128
        %v708 = vpop.trf.xlu0
        %v709 = vpop.trf.xlu0
        %v710 = vpop.trf.xlu0
        %v711 = vpop.trf.xlu0
        %v712 = vpop.trf.xlu0
        %v713 = vpop.trf.xlu0
        %v714 = vpop.trf.xlu0
        %v715 = vpop.trf.xlu0
        %v716 = vpop.trf.xlu0
        %v717 = vpop.trf.xlu0
        %v718 = vpop.trf.xlu0
        %v719 = vpop.trf.xlu0
        %v720 = vpop.trf.xlu0
        %v721 = vpop.trf.xlu0
        %v722 = vpop.trf.xlu0
        %v723 = vpop.trf.xlu0
        %724 = vxpose.xlu0.b32.start [1/16] %v579, 128
        %725 = vxpose.xlu0.b32.cont [2/16] %v581, 128
        %726 = vxpose.xlu0.b32.cont [3/16] %v584, 128
        %727 = vxpose.xlu0.b32.cont [4/16] %v586, 128
        %728 = vxpose.xlu0.b32.cont [5/16] 0.0, 128
        %729 = vxpose.xlu0.b32.cont [6/16] 0.0, 128
        %730 = vxpose.xlu0.b32.cont [7/16] 0.0, 128
        %731 = vxpose.xlu0.b32.cont [8/16] 0.0, 128
        %732 = vxpose.xlu0.b32.cont [9/16] 0.0, 128
        %733 = vxpose.xlu0.b32.cont [10/16] 0.0, 128
        %734 = vxpose.xlu0.b32.cont [11/16] 0.0, 128
        %735 = vxpose.xlu0.b32.cont [12/16] 0.0, 128
        %736 = vxpose.xlu0.b32.cont [13/16] 0.0, 128
        %737 = vxpose.xlu0.b32.cont [14/16] 0.0, 128
        %738 = vxpose.xlu0.b32.cont [15/16] 0.0, 128
        %739 = vxpose.xlu0.b32.end [16/16] 0.0, 128
        %v740 = vpop.trf.xlu0
        %v741 = vpop.trf.xlu0
        %v742 = vpop.trf.xlu0
        %v743 = vpop.trf.xlu0
        %v744 = vpop.trf.xlu0
        %v745 = vpop.trf.xlu0
        %v746 = vpop.trf.xlu0
        %v747 = vpop.trf.xlu0
        %v748 = vpop.trf.xlu0
        %v749 = vpop.trf.xlu0
        %v750 = vpop.trf.xlu0
        %v751 = vpop.trf.xlu0
        %v752 = vpop.trf.xlu0
        %v753 = vpop.trf.xlu0
        %v754 = vpop.trf.xlu0
        %v755 = vpop.trf.xlu0
        %756 = vxpose.xlu0.b32.start [1/16] %v589, 128
        %757 = vxpose.xlu0.b32.cont [2/16] %v591, 128
        %758 = vxpose.xlu0.b32.cont [3/16] %v594, 128
        %759 = vxpose.xlu0.b32.cont [4/16] %v596, 128
        %760 = vxpose.xlu0.b32.cont [5/16] 0.0, 128
        %761 = vxpose.xlu0.b32.cont [6/16] 0.0, 128
        %762 = vxpose.xlu0.b32.cont [7/16] 0.0, 128
        %763 = vxpose.xlu0.b32.cont [8/16] 0.0, 128
        %764 = vxpose.xlu0.b32.cont [9/16] 0.0, 128
        %765 = vxpose.xlu0.b32.cont [10/16] 0.0, 128
        %766 = vxpose.xlu0.b32.cont [11/16] 0.0, 128
        %767 = vxpose.xlu0.b32.cont [12/16] 0.0, 128
        %768 = vxpose.xlu0.b32.cont [13/16] 0.0, 128
        %769 = vxpose.xlu0.b32.cont [14/16] 0.0, 128
        %770 = vxpose.xlu0.b32.cont [15/16] 0.0, 128
        %771 = vxpose.xlu0.b32.end [16/16] 0.0, 128
        %v772 = vpop.trf.xlu0
        %v773 = vpop.trf.xlu0
        %v774 = vpop.trf.xlu0
        %v775 = vpop.trf.xlu0
        %v776 = vpop.trf.xlu0
        %v777 = vpop.trf.xlu0
        %v778 = vpop.trf.xlu0
        %v779 = vpop.trf.xlu0
        %v780 = vpop.trf.xlu0
        %v781 = vpop.trf.xlu0
        %v782 = vpop.trf.xlu0
        %v783 = vpop.trf.xlu0
        %v784 = vpop.trf.xlu0
        %v785 = vpop.trf.xlu0
        %v786 = vpop.trf.xlu0
        %v787 = vpop.trf.xlu0
        %788 = vxpose.xlu0.b32.start [1/16] %v599, 128
        %789 = vxpose.xlu0.b32.cont [2/16] %v601, 128
        %790 = vxpose.xlu0.b32.cont [3/16] %v604, 128
        %791 = vxpose.xlu0.b32.cont [4/16] %v606, 128
        %792 = vxpose.xlu0.b32.cont [5/16] 0.0, 128
        %793 = vxpose.xlu0.b32.cont [6/16] 0.0, 128
        %794 = vxpose.xlu0.b32.cont [7/16] 0.0, 128
        %795 = vxpose.xlu0.b32.cont [8/16] 0.0, 128
        %796 = vxpose.xlu0.b32.cont [9/16] 0.0, 128
        %797 = vxpose.xlu0.b32.cont [10/16] 0.0, 128
        %798 = vxpose.xlu0.b32.cont [11/16] 0.0, 128
        %799 = vxpose.xlu0.b32.cont [12/16] 0.0, 128
        %800 = vxpose.xlu0.b32.cont [13/16] 0.0, 128
        %801 = vxpose.xlu0.b32.cont [14/16] 0.0, 128
        %802 = vxpose.xlu0.b32.cont [15/16] 0.0, 128
        %803 = vxpose.xlu0.b32.end [16/16] 0.0, 128
        %v804 = vpop.trf.xlu0
        %v805 = vpop.trf.xlu0
        %v806 = vpop.trf.xlu0
        %v807 = vpop.trf.xlu0
        %v808 = vpop.trf.xlu0
        %v809 = vpop.trf.xlu0
        %v810 = vpop.trf.xlu0
        %v811 = vpop.trf.xlu0
        %v812 = vpop.trf.xlu0
        %v813 = vpop.trf.xlu0
        %v814 = vpop.trf.xlu0
        %v815 = vpop.trf.xlu0
        %v816 = vpop.trf.xlu0
        %v817 = vpop.trf.xlu0
        %v818 = vpop.trf.xlu0
        %v819 = vpop.trf.xlu0
        %820 = vxpose.xlu0.b32.start [1/16] %v609, 128
        %821 = vxpose.xlu0.b32.cont [2/16] %v611, 128
        %822 = vxpose.xlu0.b32.cont [3/16] %v614, 128
        %823 = vxpose.xlu0.b32.cont [4/16] %v616, 128
        %824 = vxpose.xlu0.b32.cont [5/16] 0.0, 128
        %825 = vxpose.xlu0.b32.cont [6/16] 0.0, 128
        %826 = vxpose.xlu0.b32.cont [7/16] 0.0, 128
        %827 = vxpose.xlu0.b32.cont [8/16] 0.0, 128
        %828 = vxpose.xlu0.b32.cont [9/16] 0.0, 128
        %829 = vxpose.xlu0.b32.cont [10/16] 0.0, 128
        %830 = vxpose.xlu0.b32.cont [11/16] 0.0, 128
        %831 = vxpose.xlu0.b32.cont [12/16] 0.0, 128
        %832 = vxpose.xlu0.b32.cont [13/16] 0.0, 128
        %833 = vxpose.xlu0.b32.cont [14/16] 0.0, 128
        %834 = vxpose.xlu0.b32.cont [15/16] 0.0, 128
        %835 = vxpose.xlu0.b32.end [16/16] 0.0, 128
        %v836 = vpop.trf.xlu0
        %v837 = vpop.trf.xlu0
        %v838 = vpop.trf.xlu0
        %v839 = vpop.trf.xlu0
        %v840 = vpop.trf.xlu0
        %v841 = vpop.trf.xlu0
        %v842 = vpop.trf.xlu0
        %v843 = vpop.trf.xlu0
        %v844 = vpop.trf.xlu0
        %v845 = vpop.trf.xlu0
        %v846 = vpop.trf.xlu0
        %v847 = vpop.trf.xlu0
        %v848 = vpop.trf.xlu0
        %v849 = vpop.trf.xlu0
        %v850 = vpop.trf.xlu0
        %v851 = vpop.trf.xlu0
        %852 = vxpose.xlu0.b32.start [1/16] %v619, 128
        %853 = vxpose.xlu0.b32.cont [2/16] %v621, 128
        %854 = vxpose.xlu0.b32.cont [3/16] %v624, 128
        %855 = vxpose.xlu0.b32.cont [4/16] %v626, 128
        %856 = vxpose.xlu0.b32.cont [5/16] 0.0, 128
        %857 = vxpose.xlu0.b32.cont [6/16] 0.0, 128
        %858 = vxpose.xlu0.b32.cont [7/16] 0.0, 128
        %859 = vxpose.xlu0.b32.cont [8/16] 0.0, 128
        %860 = vxpose.xlu0.b32.cont [9/16] 0.0, 128
        %861 = vxpose.xlu0.b32.cont [10/16] 0.0, 128
        %862 = vxpose.xlu0.b32.cont [11/16] 0.0, 128
        %863 = vxpose.xlu0.b32.cont [12/16] 0.0, 128
        %864 = vxpose.xlu0.b32.cont [13/16] 0.0, 128
        %865 = vxpose.xlu0.b32.cont [14/16] 0.0, 128
        %866 = vxpose.xlu0.b32.cont [15/16] 0.0, 128
        %867 = vxpose.xlu0.b32.end [16/16] 0.0, 128
        %v868 = vpop.trf.xlu0
        %v869 = vpop.trf.xlu0
        %v870 = vpop.trf.xlu0
        %v871 = vpop.trf.xlu0
        %v872 = vpop.trf.xlu0
        %v873 = vpop.trf.xlu0
        %v874 = vpop.trf.xlu0
        %v875 = vpop.trf.xlu0
        %v876 = vpop.trf.xlu0
        %v877 = vpop.trf.xlu0
        %v878 = vpop.trf.xlu0
        %v879 = vpop.trf.xlu0
        %v880 = vpop.trf.xlu0
        %v881 = vpop.trf.xlu0
        %v882 = vpop.trf.xlu0
        %v883 = vpop.trf.xlu0
        %v884 = vpack.c.bf16 %v645, %v644
        %v885 = vpack.c.bf16 %v677, %v676
        %v886 = vpack.c.bf16 %v709, %v708
        %v887 = vpack.c.bf16 %v741, %v740
        %v888 = vpack.c.bf16 %v773, %v772
        %v889 = vpack.c.bf16 %v805, %v804
        %v890 = vpack.c.bf16 %v837, %v836
        %v891 = vpack.c.bf16 %v869, %v868
        %v896 = vunpack.c.l.b16 %v266
        %v897 = vunpack.c.l.b16 %v267
        %v898 = vunpack.c.l.b16 %v268
        %v899 = vunpack.c.l.b16 %v269
        %v900 = vpack.c.b16 %v897, %v896
        %v901 = vpack.c.b16 %v899, %v898
        %v905 = vsel %vm490, %v884, 0
        %v908 = vsel %vm490, %v885, 0
        %v911 = vsel %vm490, %v886, 0
        %v914 = vsel %vm490, %v887, 0
        %v917 = vsel %vm490, %v888, 0
        %v920 = vsel %vm490, %v889, 0
        %v923 = vsel %vm490, %v890, 0
        %v926 = vsel %vm490, %v891, 0
        %928 = vmatpush.bf16.msra.mxu0 0
        %929 = vmatpush.bf16.msra.mxu0 0
        %930 = vmatpush.bf16.msra.mxu0 0
        %931 = vmatpush.bf16.msra.mxu0 0
        %932 = vmatpush.bf16.msra.mxu0 0
        %933 = vmatpush.bf16.msra.mxu0 0
        %934 = vmatpush.bf16.msra.mxu0 %v901
        %935 = vmatpush.bf16.msra.mxu0 %v900
        %936 = vmatmul.bf16.gmra.mxu0 %v905
        %v937 = vpop.f32.mrf.mxu0
        %v938 = vadd.f32 0.0, %v937
        %v939 = vpop.f32.mrf.mxu0
        %v940 = vadd.f32 0.0, %v939
        %941 = vmatmul.bf16.gmra.mxu0 %v908
        %v942 = vpop.f32.mrf.mxu0
        %v943 = vadd.f32 0.0, %v942
        %v944 = vpop.f32.mrf.mxu0
        %v945 = vadd.f32 0.0, %v944
        %946 = vmatmul.bf16.gmra.mxu0 %v911
        %v947 = vpop.f32.mrf.mxu0
        %v948 = vadd.f32 0.0, %v947
        %v949 = vpop.f32.mrf.mxu0
        %v950 = vadd.f32 0.0, %v949
        %951 = vmatmul.bf16.gmra.mxu0 %v914
        %v952 = vpop.f32.mrf.mxu0
        %v953 = vadd.f32 0.0, %v952
        %v954 = vpop.f32.mrf.mxu0
        %v955 = vadd.f32 0.0, %v954
        %956 = vmatmul.bf16.gmra.mxu0 %v917
        %v957 = vpop.f32.mrf.mxu0
        %v958 = vadd.f32 0.0, %v957
        %v959 = vpop.f32.mrf.mxu0
        %v960 = vadd.f32 0.0, %v959
        %961 = vmatmul.bf16.gmra.mxu0 %v920
        %v962 = vpop.f32.mrf.mxu0
        %v963 = vadd.f32 0.0, %v962
        %v964 = vpop.f32.mrf.mxu0
        %v965 = vadd.f32 0.0, %v964
        %966 = vmatmul.bf16.gmra.mxu0 %v923
        %v967 = vpop.f32.mrf.mxu0
        %v968 = vadd.f32 0.0, %v967
        %v969 = vpop.f32.mrf.mxu0
        %v970 = vadd.f32 0.0, %v969
        %971 = vmatmul.bf16.gmra.mxu0 %v926
        %v972 = vpop.f32.mrf.mxu0
        %v973 = vadd.f32 0.0, %v972
        %v974 = vpop.f32.mrf.mxu0
        %v975 = vadd.f32 0.0, %v974
        %976 = vdwg.mxu0
        %977 = vxpose.xlu0.b32.start [1/16] %v938, 128
        %978 = vxpose.xlu0.b32.cont [2/16] %v940, 128
        %979 = vxpose.xlu0.b32.cont [3/16] 0.0, 128
        %980 = vxpose.xlu0.b32.cont [4/16] 0.0, 128
        %981 = vxpose.xlu0.b32.cont [5/16] 0.0, 128
        %982 = vxpose.xlu0.b32.cont [6/16] 0.0, 128
        %983 = vxpose.xlu0.b32.cont [7/16] 0.0, 128
        %984 = vxpose.xlu0.b32.cont [8/16] 0.0, 128
        %985 = vxpose.xlu0.b32.cont [9/16] 0.0, 128
        %986 = vxpose.xlu0.b32.cont [10/16] 0.0, 128
        %987 = vxpose.xlu0.b32.cont [11/16] 0.0, 128
        %988 = vxpose.xlu0.b32.cont [12/16] 0.0, 128
        %989 = vxpose.xlu0.b32.cont [13/16] 0.0, 128
        %990 = vxpose.xlu0.b32.cont [14/16] 0.0, 128
        %991 = vxpose.xlu0.b32.cont [15/16] 0.0, 128
        %992 = vxpose.xlu0.b32.end [16/16] 0.0, 128
        %v993 = vpop.trf.xlu0
        %v994 = vpop.trf.xlu0
        %v995 = vpop.trf.xlu0
        %v996 = vpop.trf.xlu0
        %v997 = vpop.trf.xlu0
        %v998 = vpop.trf.xlu0
        %v999 = vpop.trf.xlu0
        %v1000 = vpop.trf.xlu0
        %v1001 = vpop.trf.xlu0
        %v1002 = vpop.trf.xlu0
        %v1003 = vpop.trf.xlu0
        %v1004 = vpop.trf.xlu0
        %v1005 = vpop.trf.xlu0
        %v1006 = vpop.trf.xlu0
        %v1007 = vpop.trf.xlu0
        %v1008 = vpop.trf.xlu0
        %1009 = vxpose.xlu0.b32.start [1/16] %v943, 128
        %1010 = vxpose.xlu0.b32.cont [2/16] %v945, 128
        %1011 = vxpose.xlu0.b32.cont [3/16] 0.0, 128
        %1012 = vxpose.xlu0.b32.cont [4/16] 0.0, 128
        %1013 = vxpose.xlu0.b32.cont [5/16] 0.0, 128
        %1014 = vxpose.xlu0.b32.cont [6/16] 0.0, 128
        %1015 = vxpose.xlu0.b32.cont [7/16] 0.0, 128
        %1016 = vxpose.xlu0.b32.cont [8/16] 0.0, 128
        %1017 = vxpose.xlu0.b32.cont [9/16] 0.0, 128
        %1018 = vxpose.xlu0.b32.cont [10/16] 0.0, 128
        %1019 = vxpose.xlu0.b32.cont [11/16] 0.0, 128
        %1020 = vxpose.xlu0.b32.cont [12/16] 0.0, 128
        %1021 = vxpose.xlu0.b32.cont [13/16] 0.0, 128
        %1022 = vxpose.xlu0.b32.cont [14/16] 0.0, 128
        %1023 = vxpose.xlu0.b32.cont [15/16] 0.0, 128
        %1024 = vxpose.xlu0.b32.end [16/16] 0.0, 128
        %v1025 = vpop.trf.xlu0
        %v1026 = vpop.trf.xlu0
        %v1027 = vpop.trf.xlu0
        %v1028 = vpop.trf.xlu0
        %v1029 = vpop.trf.xlu0
        %v1030 = vpop.trf.xlu0
        %v1031 = vpop.trf.xlu0
        %v1032 = vpop.trf.xlu0
        %v1033 = vpop.trf.xlu0
        %v1034 = vpop.trf.xlu0
        %v1035 = vpop.trf.xlu0
        %v1036 = vpop.trf.xlu0
        %v1037 = vpop.trf.xlu0
        %v1038 = vpop.trf.xlu0
        %v1039 = vpop.trf.xlu0
        %v1040 = vpop.trf.xlu0
        %1041 = vxpose.xlu0.b32.start [1/16] %v948, 128
        %1042 = vxpose.xlu0.b32.cont [2/16] %v950, 128
        %1043 = vxpose.xlu0.b32.cont [3/16] 0.0, 128
        %1044 = vxpose.xlu0.b32.cont [4/16] 0.0, 128
        %1045 = vxpose.xlu0.b32.cont [5/16] 0.0, 128
        %1046 = vxpose.xlu0.b32.cont [6/16] 0.0, 128
        %1047 = vxpose.xlu0.b32.cont [7/16] 0.0, 128
        %1048 = vxpose.xlu0.b32.cont [8/16] 0.0, 128
        %1049 = vxpose.xlu0.b32.cont [9/16] 0.0, 128
        %1050 = vxpose.xlu0.b32.cont [10/16] 0.0, 128
        %1051 = vxpose.xlu0.b32.cont [11/16] 0.0, 128
        %1052 = vxpose.xlu0.b32.cont [12/16] 0.0, 128
        %1053 = vxpose.xlu0.b32.cont [13/16] 0.0, 128
        %1054 = vxpose.xlu0.b32.cont [14/16] 0.0, 128
        %1055 = vxpose.xlu0.b32.cont [15/16] 0.0, 128
        %1056 = vxpose.xlu0.b32.end [16/16] 0.0, 128
        %v1057 = vpop.trf.xlu0
        %v1058 = vpop.trf.xlu0
        %v1059 = vpop.trf.xlu0
        %v1060 = vpop.trf.xlu0
        %v1061 = vpop.trf.xlu0
        %v1062 = vpop.trf.xlu0
        %v1063 = vpop.trf.xlu0
        %v1064 = vpop.trf.xlu0
        %v1065 = vpop.trf.xlu0
        %v1066 = vpop.trf.xlu0
        %v1067 = vpop.trf.xlu0
        %v1068 = vpop.trf.xlu0
        %v1069 = vpop.trf.xlu0
        %v1070 = vpop.trf.xlu0
        %v1071 = vpop.trf.xlu0
        %v1072 = vpop.trf.xlu0
        %1073 = vxpose.xlu0.b32.start [1/16] %v953, 128
        %1074 = vxpose.xlu0.b32.cont [2/16] %v955, 128
        %1075 = vxpose.xlu0.b32.cont [3/16] 0.0, 128
        %1076 = vxpose.xlu0.b32.cont [4/16] 0.0, 128
        %1077 = vxpose.xlu0.b32.cont [5/16] 0.0, 128
        %1078 = vxpose.xlu0.b32.cont [6/16] 0.0, 128
        %1079 = vxpose.xlu0.b32.cont [7/16] 0.0, 128
        %1080 = vxpose.xlu0.b32.cont [8/16] 0.0, 128
        %1081 = vxpose.xlu0.b32.cont [9/16] 0.0, 128
        %1082 = vxpose.xlu0.b32.cont [10/16] 0.0, 128
        %1083 = vxpose.xlu0.b32.cont [11/16] 0.0, 128
        %1084 = vxpose.xlu0.b32.cont [12/16] 0.0, 128
        %1085 = vxpose.xlu0.b32.cont [13/16] 0.0, 128
        %1086 = vxpose.xlu0.b32.cont [14/16] 0.0, 128
        %1087 = vxpose.xlu0.b32.cont [15/16] 0.0, 128
        %1088 = vxpose.xlu0.b32.end [16/16] 0.0, 128
        %v1089 = vpop.trf.xlu0
        %v1090 = vpop.trf.xlu0
        %v1091 = vpop.trf.xlu0
        %v1092 = vpop.trf.xlu0
        %v1093 = vpop.trf.xlu0
        %v1094 = vpop.trf.xlu0
        %v1095 = vpop.trf.xlu0
        %v1096 = vpop.trf.xlu0
        %v1097 = vpop.trf.xlu0
        %v1098 = vpop.trf.xlu0
        %v1099 = vpop.trf.xlu0
        %v1100 = vpop.trf.xlu0
        %v1101 = vpop.trf.xlu0
        %v1102 = vpop.trf.xlu0
        %v1103 = vpop.trf.xlu0
        %v1104 = vpop.trf.xlu0
        %1105 = vxpose.xlu0.b32.start [1/16] %v958, 128
        %1106 = vxpose.xlu0.b32.cont [2/16] %v960, 128
        %1107 = vxpose.xlu0.b32.cont [3/16] 0.0, 128
        %1108 = vxpose.xlu0.b32.cont [4/16] 0.0, 128
        %1109 = vxpose.xlu0.b32.cont [5/16] 0.0, 128
        %1110 = vxpose.xlu0.b32.cont [6/16] 0.0, 128
        %1111 = vxpose.xlu0.b32.cont [7/16] 0.0, 128
        %1112 = vxpose.xlu0.b32.cont [8/16] 0.0, 128
        %1113 = vxpose.xlu0.b32.cont [9/16] 0.0, 128
        %1114 = vxpose.xlu0.b32.cont [10/16] 0.0, 128
        %1115 = vxpose.xlu0.b32.cont [11/16] 0.0, 128
        %1116 = vxpose.xlu0.b32.cont [12/16] 0.0, 128
        %1117 = vxpose.xlu0.b32.cont [13/16] 0.0, 128
        %1118 = vxpose.xlu0.b32.cont [14/16] 0.0, 128
        %1119 = vxpose.xlu0.b32.cont [15/16] 0.0, 128
        %1120 = vxpose.xlu0.b32.end [16/16] 0.0, 128
        %v1121 = vpop.trf.xlu0
        %v1122 = vpop.trf.xlu0
        %v1123 = vpop.trf.xlu0
        %v1124 = vpop.trf.xlu0
        %v1125 = vpop.trf.xlu0
        %v1126 = vpop.trf.xlu0
        %v1127 = vpop.trf.xlu0
        %v1128 = vpop.trf.xlu0
        %v1129 = vpop.trf.xlu0
        %v1130 = vpop.trf.xlu0
        %v1131 = vpop.trf.xlu0
        %v1132 = vpop.trf.xlu0
        %v1133 = vpop.trf.xlu0
        %v1134 = vpop.trf.xlu0
        %v1135 = vpop.trf.xlu0
        %v1136 = vpop.trf.xlu0
        %1137 = vxpose.xlu0.b32.start [1/16] %v963, 128
        %1138 = vxpose.xlu0.b32.cont [2/16] %v965, 128
        %1139 = vxpose.xlu0.b32.cont [3/16] 0.0, 128
        %1140 = vxpose.xlu0.b32.cont [4/16] 0.0, 128
        %1141 = vxpose.xlu0.b32.cont [5/16] 0.0, 128
        %1142 = vxpose.xlu0.b32.cont [6/16] 0.0, 128
        %1143 = vxpose.xlu0.b32.cont [7/16] 0.0, 128
        %1144 = vxpose.xlu0.b32.cont [8/16] 0.0, 128
        %1145 = vxpose.xlu0.b32.cont [9/16] 0.0, 128
        %1146 = vxpose.xlu0.b32.cont [10/16] 0.0, 128
        %1147 = vxpose.xlu0.b32.cont [11/16] 0.0, 128
        %1148 = vxpose.xlu0.b32.cont [12/16] 0.0, 128
        %1149 = vxpose.xlu0.b32.cont [13/16] 0.0, 128
        %1150 = vxpose.xlu0.b32.cont [14/16] 0.0, 128
        %1151 = vxpose.xlu0.b32.cont [15/16] 0.0, 128
        %1152 = vxpose.xlu0.b32.end [16/16] 0.0, 128
        %v1153 = vpop.trf.xlu0
        %v1154 = vpop.trf.xlu0
        %v1155 = vpop.trf.xlu0
        %v1156 = vpop.trf.xlu0
        %v1157 = vpop.trf.xlu0
        %v1158 = vpop.trf.xlu0
        %v1159 = vpop.trf.xlu0
        %v1160 = vpop.trf.xlu0
        %v1161 = vpop.trf.xlu0
        %v1162 = vpop.trf.xlu0
        %v1163 = vpop.trf.xlu0
        %v1164 = vpop.trf.xlu0
        %v1165 = vpop.trf.xlu0
        %v1166 = vpop.trf.xlu0
        %v1167 = vpop.trf.xlu0
        %v1168 = vpop.trf.xlu0
        %1169 = vxpose.xlu0.b32.start [1/16] %v968, 128
        %1170 = vxpose.xlu0.b32.cont [2/16] %v970, 128
        %1171 = vxpose.xlu0.b32.cont [3/16] 0.0, 128
        %1172 = vxpose.xlu0.b32.cont [4/16] 0.0, 128
        %1173 = vxpose.xlu0.b32.cont [5/16] 0.0, 128
        %1174 = vxpose.xlu0.b32.cont [6/16] 0.0, 128
        %1175 = vxpose.xlu0.b32.cont [7/16] 0.0, 128
        %1176 = vxpose.xlu0.b32.cont [8/16] 0.0, 128
        %1177 = vxpose.xlu0.b32.cont [9/16] 0.0, 128
        %1178 = vxpose.xlu0.b32.cont [10/16] 0.0, 128
        %1179 = vxpose.xlu0.b32.cont [11/16] 0.0, 128
        %1180 = vxpose.xlu0.b32.cont [12/16] 0.0, 128
        %1181 = vxpose.xlu0.b32.cont [13/16] 0.0, 128
        %1182 = vxpose.xlu0.b32.cont [14/16] 0.0, 128
        %1183 = vxpose.xlu0.b32.cont [15/16] 0.0, 128
        %1184 = vxpose.xlu0.b32.end [16/16] 0.0, 128
        %v1185 = vpop.trf.xlu0
        %v1186 = vpop.trf.xlu0
        %v1187 = vpop.trf.xlu0
        %v1188 = vpop.trf.xlu0
        %v1189 = vpop.trf.xlu0
        %v1190 = vpop.trf.xlu0
        %v1191 = vpop.trf.xlu0
        %v1192 = vpop.trf.xlu0
        %v1193 = vpop.trf.xlu0
        %v1194 = vpop.trf.xlu0
        %v1195 = vpop.trf.xlu0
        %v1196 = vpop.trf.xlu0
        %v1197 = vpop.trf.xlu0
        %v1198 = vpop.trf.xlu0
        %v1199 = vpop.trf.xlu0
        %v1200 = vpop.trf.xlu0
        %1201 = vxpose.xlu0.b32.start [1/16] %v973, 128
        %1202 = vxpose.xlu0.b32.cont [2/16] %v975, 128
        %1203 = vxpose.xlu0.b32.cont [3/16] 0.0, 128
        %1204 = vxpose.xlu0.b32.cont [4/16] 0.0, 128
        %1205 = vxpose.xlu0.b32.cont [5/16] 0.0, 128
        %1206 = vxpose.xlu0.b32.cont [6/16] 0.0, 128
        %1207 = vxpose.xlu0.b32.cont [7/16] 0.0, 128
        %1208 = vxpose.xlu0.b32.cont [8/16] 0.0, 128
        %1209 = vxpose.xlu0.b32.cont [9/16] 0.0, 128
        %1210 = vxpose.xlu0.b32.cont [10/16] 0.0, 128
        %1211 = vxpose.xlu0.b32.cont [11/16] 0.0, 128
        %1212 = vxpose.xlu0.b32.cont [12/16] 0.0, 128
        %1213 = vxpose.xlu0.b32.cont [13/16] 0.0, 128
        %1214 = vxpose.xlu0.b32.cont [14/16] 0.0, 128
        %1215 = vxpose.xlu0.b32.cont [15/16] 0.0, 128
        %1216 = vxpose.xlu0.b32.end [16/16] 0.0, 128
        %v1217 = vpop.trf.xlu0
        %v1218 = vpop.trf.xlu0
        %v1219 = vpop.trf.xlu0
        %v1220 = vpop.trf.xlu0
        %v1221 = vpop.trf.xlu0
        %v1222 = vpop.trf.xlu0
        %v1223 = vpop.trf.xlu0
        %v1224 = vpop.trf.xlu0
        %v1225 = vpop.trf.xlu0
        %v1226 = vpop.trf.xlu0
        %v1227 = vpop.trf.xlu0
        %v1228 = vpop.trf.xlu0
        %v1229 = vpop.trf.xlu0
        %v1230 = vpop.trf.xlu0
        %v1231 = vpop.trf.xlu0
        %v1232 = vpop.trf.xlu0
        %v1233 = vpack.c.bf16 %v993, %v993
        %v1234 = vpack.c.bf16 %v994, %v994
        %v1235 = vpack.c.bf16 %v1025, %v1025
        %v1236 = vpack.c.bf16 %v1026, %v1026
        %v1237 = vpack.c.bf16 %v1057, %v1057
        %v1238 = vpack.c.bf16 %v1058, %v1058
        %v1239 = vpack.c.bf16 %v1089, %v1089
        %v1240 = vpack.c.bf16 %v1090, %v1090
        %v1241 = vpack.c.bf16 %v1121, %v1121
        %v1242 = vpack.c.bf16 %v1122, %v1122
        %v1243 = vpack.c.bf16 %v1153, %v1153
        %v1244 = vpack.c.bf16 %v1154, %v1154
        %v1245 = vpack.c.bf16 %v1185, %v1185
        %v1246 = vpack.c.bf16 %v1186, %v1186
        %v1247 = vpack.c.bf16 %v1217, %v1217
        %v1248 = vpack.c.bf16 %v1218, %v1218
        %vm1249 = vcmask 125952
        %1250 = vst.msk [vmem:[%s257] sm:$0xf] %vm1249, %v1233
        %1251 = vst.msk [vmem:[%s257 + $0x4] sm:$0xf] %vm1249, %v1234
        %1252 = vst.msk [vmem:[%s257 + $0x8] sm:$0xf] %vm1249, %v1235
        %1253 = vst.msk [vmem:[%s257 + $0xc] sm:$0xf] %vm1249, %v1236
        %1254 = vst.msk [vmem:[%s257 + $0x10] sm:$0xf] %vm1249, %v1237
        %1255 = vst.msk [vmem:[%s257 + $0x14] sm:$0xf] %vm1249, %v1238
        %1256 = vst.msk [vmem:[%s257 + $0x18] sm:$0xf] %vm1249, %v1239
        %1257 = vst.msk [vmem:[%s257 + $0x1c] sm:$0xf] %vm1249, %v1240
        %1258 = vst.msk [vmem:[%s257 + $0x20] sm:$0xf] %vm1249, %v1241
        %1259 = vst.msk [vmem:[%s257 + $0x24] sm:$0xf] %vm1249, %v1242
        %1260 = vst.msk [vmem:[%s257 + $0x28] sm:$0xf] %vm1249, %v1243
        %1261 = vst.msk [vmem:[%s257 + $0x2c] sm:$0xf] %vm1249, %v1244
        %1262 = vst.msk [vmem:[%s257 + $0x30] sm:$0xf] %vm1249, %v1245
        %1263 = vst.msk [vmem:[%s257 + $0x34] sm:$0xf] %vm1249, %v1246
        %1264 = vst.msk [vmem:[%s257 + $0x38] sm:$0xf] %vm1249, %v1247
        %1265 = vst.msk [vmem:[%s257 + $0x3c] sm:$0xf] %vm1249, %v1248
        %v1266 = vld [vmem:[%s218] sm:$0xff]
        %v1267 = vld [vmem:[%s218 + $0x8] sm:$0xff]
        %v1268 = vld [vmem:[%s218 + $0x10] sm:$0xff]
        %v1269 = vld [vmem:[%s218 + $0x18] sm:$0xff]
        %v1270 = vld [vmem:[%s218 + $0x20] sm:$0xff]
        %v1271 = vld [vmem:[%s218 + $0x28] sm:$0xff]
        %v1272 = vld [vmem:[%s218 + $0x30] sm:$0xff]
        %v1273 = vld [vmem:[%s218 + $0x38] sm:$0xff]
        %v1274 = vld [vmem:[%s218 + $0x40] sm:$0xff]
        %v1275 = vld [vmem:[%s218 + $0x48] sm:$0xff]
        %v1276 = vld [vmem:[%s218 + $0x50] sm:$0xff]
        %v1277 = vld [vmem:[%s218 + $0x58] sm:$0xff]
        %v1278 = vld [vmem:[%s218 + $0x60] sm:$0xff]
        %v1279 = vld [vmem:[%s218 + $0x68] sm:$0xff]
        %v1280 = vld [vmem:[%s218 + $0x70] sm:$0xff]
        %v1281 = vld [vmem:[%s218 + $0x78] sm:$0xff]
        %v1282 = vld [vmem:[%s218 + $0x80] sm:$0xff]
        %v1283 = vld [vmem:[%s218 + $0x88] sm:$0xff]
        %v1284 = vld [vmem:[%s218 + $0x90] sm:$0xff]
        %v1285 = vld [vmem:[%s218 + $0x98] sm:$0xff]
        %v1286 = vld [vmem:[%s218 + $0xa0] sm:$0xff]
        %v1287 = vld [vmem:[%s218 + $0xa8] sm:$0xff]
        %v1288 = vld [vmem:[%s218 + $0xb0] sm:$0xff]
        %v1289 = vld [vmem:[%s218 + $0xb8] sm:$0xff]
        %v1290 = vld [vmem:[%s218 + $0xc0] sm:$0xff]
        %v1291 = vld [vmem:[%s218 + $0xc8] sm:$0xff]
        %v1292 = vld [vmem:[%s218 + $0xd0] sm:$0xff]
        %v1293 = vld [vmem:[%s218 + $0xd8] sm:$0xff]
        %v1294 = vld [vmem:[%s218 + $0xe0] sm:$0xff]
        %v1295 = vld [vmem:[%s218 + $0xe8] sm:$0xff]
        %v1296 = vld [vmem:[%s218 + $0xf0] sm:$0xff]
        %v1297 = vld [vmem:[%s218 + $0xf8] sm:$0xff]
        %v1298 = vmax.f32 %v1266, -1.0
        %v1299 = vmax.f32 %v1267, -1.0
        %v1300 = vmax.f32 %v1268, -1.0
        %v1301 = vmax.f32 %v1269, -1.0
        %v1302 = vmax.f32 %v1270, -1.0
        %v1303 = vmax.f32 %v1271, -1.0
        %v1304 = vmax.f32 %v1272, -1.0
        %v1305 = vmax.f32 %v1273, -1.0
        %v1306 = vmax.f32 %v1274, -1.0
        %v1307 = vmax.f32 %v1275, -1.0
        %v1308 = vmax.f32 %v1276, -1.0
        %v1309 = vmax.f32 %v1277, -1.0
        %v1310 = vmax.f32 %v1278, -1.0
        %v1311 = vmax.f32 %v1279, -1.0
        %v1312 = vmax.f32 %v1280, -1.0
        %v1313 = vmax.f32 %v1281, -1.0
        %v1314 = vmax.f32 %v1282, -1.0
        %v1315 = vmax.f32 %v1283, -1.0
        %v1316 = vmax.f32 %v1284, -1.0
        %v1317 = vmax.f32 %v1285, -1.0
        %v1318 = vmax.f32 %v1286, -1.0
        %v1319 = vmax.f32 %v1287, -1.0
        %v1320 = vmax.f32 %v1288, -1.0
        %v1321 = vmax.f32 %v1289, -1.0
        %v1322 = vmax.f32 %v1290, -1.0
        %v1323 = vmax.f32 %v1291, -1.0
        %v1324 = vmax.f32 %v1292, -1.0
        %v1325 = vmax.f32 %v1293, -1.0
        %v1326 = vmax.f32 %v1294, -1.0
        %v1327 = vmax.f32 %v1295, -1.0
        %v1328 = vmax.f32 %v1296, -1.0
        %v1329 = vmax.f32 %v1297, -1.0
        %v1330 = vmin.f32 %v1298, 1.0
        %v1331 = vmin.f32 %v1299, 1.0
        %v1332 = vmin.f32 %v1300, 1.0
        %v1333 = vmin.f32 %v1301, 1.0
        %v1334 = vmin.f32 %v1302, 1.0
        %v1335 = vmin.f32 %v1303, 1.0
        %v1336 = vmin.f32 %v1304, 1.0
        %v1337 = vmin.f32 %v1305, 1.0
        %v1338 = vmin.f32 %v1306, 1.0
        %v1339 = vmin.f32 %v1307, 1.0
        %v1340 = vmin.f32 %v1308, 1.0
        %v1341 = vmin.f32 %v1309, 1.0
        %v1342 = vmin.f32 %v1310, 1.0
        %v1343 = vmin.f32 %v1311, 1.0
        %v1344 = vmin.f32 %v1312, 1.0
        %v1345 = vmin.f32 %v1313, 1.0
        %v1346 = vmin.f32 %v1314, 1.0
        %v1347 = vmin.f32 %v1315, 1.0
        %v1348 = vmin.f32 %v1316, 1.0
        %v1349 = vmin.f32 %v1317, 1.0
        %v1350 = vmin.f32 %v1318, 1.0
        %v1351 = vmin.f32 %v1319, 1.0
        %v1352 = vmin.f32 %v1320, 1.0
        %v1353 = vmin.f32 %v1321, 1.0
        %v1354 = vmin.f32 %v1322, 1.0
        %v1355 = vmin.f32 %v1323, 1.0
        %v1356 = vmin.f32 %v1324, 1.0
        %v1357 = vmin.f32 %v1325, 1.0
        %v1358 = vmin.f32 %v1326, 1.0
        %v1359 = vmin.f32 %v1327, 1.0
        %v1360 = vmin.f32 %v1328, 1.0
        %v1361 = vmin.f32 %v1329, 1.0
        %v1362 = vpack.c.bf16 %v1330, %v1330
        %v1363 = vpack.c.bf16 %v1331, %v1331
        %v1364 = vpack.c.bf16 %v1332, %v1332
        %v1365 = vpack.c.bf16 %v1333, %v1333
        %v1366 = vpack.c.bf16 %v1334, %v1334
        %v1367 = vpack.c.bf16 %v1335, %v1335
        %v1368 = vpack.c.bf16 %v1336, %v1336
        %v1369 = vpack.c.bf16 %v1337, %v1337
        %v1370 = vpack.c.bf16 %v1338, %v1338
        %v1371 = vpack.c.bf16 %v1339, %v1339
        %v1372 = vpack.c.bf16 %v1340, %v1340
        %v1373 = vpack.c.bf16 %v1341, %v1341
        %v1374 = vpack.c.bf16 %v1342, %v1342
        %v1375 = vpack.c.bf16 %v1343, %v1343
        %v1376 = vpack.c.bf16 %v1344, %v1344
        %v1377 = vpack.c.bf16 %v1345, %v1345
        %v1378 = vpack.c.bf16 %v1346, %v1346
        %v1379 = vpack.c.bf16 %v1347, %v1347
        %v1380 = vpack.c.bf16 %v1348, %v1348
        %v1381 = vpack.c.bf16 %v1349, %v1349
        %v1382 = vpack.c.bf16 %v1350, %v1350
        %v1383 = vpack.c.bf16 %v1351, %v1351
        %v1384 = vpack.c.bf16 %v1352, %v1352
        %v1385 = vpack.c.bf16 %v1353, %v1353
        %v1386 = vpack.c.bf16 %v1354, %v1354
        %v1387 = vpack.c.bf16 %v1355, %v1355
        %v1388 = vpack.c.bf16 %v1356, %v1356
        %v1389 = vpack.c.bf16 %v1357, %v1357
        %v1390 = vpack.c.bf16 %v1358, %v1358
        %v1391 = vpack.c.bf16 %v1359, %v1359
        %v1392 = vpack.c.bf16 %v1360, %v1360
        %v1393 = vpack.c.bf16 %v1361, %v1361
        %v1426 = vunpack.c.l.b16 %v1362
        %v1427 = vunpack.c.l.b16 %v1363
        %v1428 = vunpack.c.l.b16 %v1364
        %v1429 = vunpack.c.l.b16 %v1365
        %v1430 = vunpack.c.l.b16 %v1366
        %v1431 = vunpack.c.l.b16 %v1367
        %v1432 = vunpack.c.l.b16 %v1368
        %v1433 = vunpack.c.l.b16 %v1369
        %v1434 = vunpack.c.l.b16 %v1370
        %v1435 = vunpack.c.l.b16 %v1371
        %v1436 = vunpack.c.l.b16 %v1372
        %v1437 = vunpack.c.l.b16 %v1373
        %v1438 = vunpack.c.l.b16 %v1374
        %v1439 = vunpack.c.l.b16 %v1375
        %v1440 = vunpack.c.l.b16 %v1376
        %v1441 = vunpack.c.l.b16 %v1377
        %v1442 = vunpack.c.l.b16 %v1378
        %v1443 = vunpack.c.l.b16 %v1379
        %v1444 = vunpack.c.l.b16 %v1380
        %v1445 = vunpack.c.l.b16 %v1381
        %v1446 = vunpack.c.l.b16 %v1382
        %v1447 = vunpack.c.l.b16 %v1383
        %v1448 = vunpack.c.l.b16 %v1384
        %v1449 = vunpack.c.l.b16 %v1385
        %v1450 = vunpack.c.l.b16 %v1386
        %v1451 = vunpack.c.l.b16 %v1387
        %v1452 = vunpack.c.l.b16 %v1388
        %v1453 = vunpack.c.l.b16 %v1389
        %v1454 = vunpack.c.l.b16 %v1390
        %v1455 = vunpack.c.l.b16 %v1391
        %v1456 = vunpack.c.l.b16 %v1392
        %v1457 = vunpack.c.l.b16 %v1393
        %v1458 = vpack.c.b16 %v1427, %v1426
        %v1459 = vpack.c.b16 %v1429, %v1428
        %v1460 = vpack.c.b16 %v1431, %v1430
        %v1461 = vpack.c.b16 %v1433, %v1432
        %v1462 = vpack.c.b16 %v1435, %v1434
        %v1463 = vpack.c.b16 %v1437, %v1436
        %v1464 = vpack.c.b16 %v1439, %v1438
        %v1465 = vpack.c.b16 %v1441, %v1440
        %v1466 = vpack.c.b16 %v1443, %v1442
        %v1467 = vpack.c.b16 %v1445, %v1444
        %v1468 = vpack.c.b16 %v1447, %v1446
        %v1469 = vpack.c.b16 %v1449, %v1448
        %v1470 = vpack.c.b16 %v1451, %v1450
        %v1471 = vpack.c.b16 %v1453, %v1452
        %v1472 = vpack.c.b16 %v1455, %v1454
        %v1473 = vpack.c.b16 %v1457, %v1456
        %v1475 = vsel %vm490, %v1458, 0
        %v1478 = vsel %vm490, %v1459, 0
        %v1481 = vsel %vm490, %v1460, 0
        %v1484 = vsel %vm490, %v1461, 0
        %v1487 = vsel %vm490, %v1462, 0
        %v1490 = vsel %vm490, %v1463, 0
        %v1493 = vsel %vm490, %v1464, 0
        %v1496 = vsel %vm490, %v1465, 0
        %v1499 = vsel %vm490, %v1466, 0
        %v1502 = vsel %vm490, %v1467, 0
        %v1505 = vsel %vm490, %v1468, 0
        %v1508 = vsel %vm490, %v1469, 0
        %v1511 = vsel %vm490, %v1470, 0
        %v1514 = vsel %vm490, %v1471, 0
        %v1517 = vsel %vm490, %v1472, 0
        %v1520 = vsel %vm490, %v1473, 0
        %1522 = vmatpush.bf16.msra.mxu0 0
        %1523 = vmatpush.bf16.msra.mxu0 0
        %1524 = vmatpush.bf16.msra.mxu0 0
        %1525 = vmatpush.bf16.msra.mxu0 0
        %1526 = vmatpush.bf16.msra.mxu0 0
        %1527 = vmatpush.bf16.msra.mxu0 0
        %1528 = vmatpush.bf16.msra.mxu0 %v487
        %1529 = vmatpush.bf16.msra.mxu0 %v486
        %1530 = vmatmul.bf16.gmra.mxu0 %v1475
        %v1531 = vpop.f32.mrf.mxu0
        %v1532 = vadd.f32 0.0, %v1531
        %v1533 = vpop.f32.mrf.mxu0
        %v1534 = vadd.f32 0.0, %v1533
        %1535 = vmatmul.bf16.gmra.mxu0 %v1478
        %v1536 = vpop.f32.mrf.mxu0
        %v1537 = vadd.f32 0.0, %v1536
        %v1538 = vpop.f32.mrf.mxu0
        %v1539 = vadd.f32 0.0, %v1538
        %1540 = vmatmul.bf16.gmra.mxu0 %v1481
        %v1541 = vpop.f32.mrf.mxu0
        %v1542 = vadd.f32 0.0, %v1541
        %v1543 = vpop.f32.mrf.mxu0
        %v1544 = vadd.f32 0.0, %v1543
        %1545 = vmatmul.bf16.gmra.mxu0 %v1484
        %v1546 = vpop.f32.mrf.mxu0
        %v1547 = vadd.f32 0.0, %v1546
        %v1548 = vpop.f32.mrf.mxu0
        %v1549 = vadd.f32 0.0, %v1548
        %1550 = vmatmul.bf16.gmra.mxu0 %v1487
        %v1551 = vpop.f32.mrf.mxu0
        %v1552 = vadd.f32 0.0, %v1551
        %v1553 = vpop.f32.mrf.mxu0
        %v1554 = vadd.f32 0.0, %v1553
        %1555 = vmatmul.bf16.gmra.mxu0 %v1490
        %v1556 = vpop.f32.mrf.mxu0
        %v1557 = vadd.f32 0.0, %v1556
        %v1558 = vpop.f32.mrf.mxu0
        %v1559 = vadd.f32 0.0, %v1558
        %1560 = vmatmul.bf16.gmra.mxu0 %v1493
        %v1561 = vpop.f32.mrf.mxu0
        %v1562 = vadd.f32 0.0, %v1561
        %v1563 = vpop.f32.mrf.mxu0
        %v1564 = vadd.f32 0.0, %v1563
        %1565 = vmatmul.bf16.gmra.mxu0 %v1496
        %v1566 = vpop.f32.mrf.mxu0
        %v1567 = vadd.f32 0.0, %v1566
        %v1568 = vpop.f32.mrf.mxu0
        %v1569 = vadd.f32 0.0, %v1568
        %1570 = vmatmul.bf16.gmra.mxu0 %v1499
        %v1571 = vpop.f32.mrf.mxu0
        %v1572 = vadd.f32 0.0, %v1571
        %v1573 = vpop.f32.mrf.mxu0
        %v1574 = vadd.f32 0.0, %v1573
        %1575 = vmatmul.bf16.gmra.mxu0 %v1502
        %v1576 = vpop.f32.mrf.mxu0
        %v1577 = vadd.f32 0.0, %v1576
        %v1578 = vpop.f32.mrf.mxu0
        %v1579 = vadd.f32 0.0, %v1578
        %1580 = vmatmul.bf16.gmra.mxu0 %v1505
        %v1581 = vpop.f32.mrf.mxu0
        %v1582 = vadd.f32 0.0, %v1581
        %v1583 = vpop.f32.mrf.mxu0
        %v1584 = vadd.f32 0.0, %v1583
        %1585 = vmatmul.bf16.gmra.mxu0 %v1508
        %v1586 = vpop.f32.mrf.mxu0
        %v1587 = vadd.f32 0.0, %v1586
        %v1588 = vpop.f32.mrf.mxu0
        %v1589 = vadd.f32 0.0, %v1588
        %1590 = vmatmul.bf16.gmra.mxu0 %v1511
        %v1591 = vpop.f32.mrf.mxu0
        %v1592 = vadd.f32 0.0, %v1591
        %v1593 = vpop.f32.mrf.mxu0
        %v1594 = vadd.f32 0.0, %v1593
        %1595 = vmatmul.bf16.gmra.mxu0 %v1514
        %v1596 = vpop.f32.mrf.mxu0
        %v1597 = vadd.f32 0.0, %v1596
        %v1598 = vpop.f32.mrf.mxu0
        %v1599 = vadd.f32 0.0, %v1598
        %1600 = vmatmul.bf16.gmra.mxu0 %v1517
        %v1601 = vpop.f32.mrf.mxu0
        %v1602 = vadd.f32 0.0, %v1601
        %v1603 = vpop.f32.mrf.mxu0
        %v1604 = vadd.f32 0.0, %v1603
        %1605 = vmatmul.bf16.gmra.mxu0 %v1520
        %v1606 = vpop.f32.mrf.mxu0
        %v1607 = vadd.f32 0.0, %v1606
        %v1608 = vpop.f32.mrf.mxu0
        %v1609 = vadd.f32 0.0, %v1608
        %1610 = vdwg.mxu0
        %1611 = vxpose.xlu0.b32.start [1/16] %v1532, 128
        %1612 = vxpose.xlu0.b32.cont [2/16] %v1534, 128
        %1613 = vxpose.xlu0.b32.cont [3/16] %v1537, 128
        %1614 = vxpose.xlu0.b32.cont [4/16] %v1539, 128
        %1615 = vxpose.xlu0.b32.cont [5/16] 0.0, 128
        %1616 = vxpose.xlu0.b32.cont [6/16] 0.0, 128
        %1617 = vxpose.xlu0.b32.cont [7/16] 0.0, 128
        %1618 = vxpose.xlu0.b32.cont [8/16] 0.0, 128
        %1619 = vxpose.xlu0.b32.cont [9/16] 0.0, 128
        %1620 = vxpose.xlu0.b32.cont [10/16] 0.0, 128
        %1621 = vxpose.xlu0.b32.cont [11/16] 0.0, 128
        %1622 = vxpose.xlu0.b32.cont [12/16] 0.0, 128
        %1623 = vxpose.xlu0.b32.cont [13/16] 0.0, 128
        %1624 = vxpose.xlu0.b32.cont [14/16] 0.0, 128
        %1625 = vxpose.xlu0.b32.cont [15/16] 0.0, 128
        %1626 = vxpose.xlu0.b32.end [16/16] 0.0, 128
        %v1627 = vpop.trf.xlu0
        %v1628 = vpop.trf.xlu0
        %v1629 = vpop.trf.xlu0
        %v1630 = vpop.trf.xlu0
        %v1631 = vpop.trf.xlu0
        %v1632 = vpop.trf.xlu0
        %v1633 = vpop.trf.xlu0
        %v1634 = vpop.trf.xlu0
        %v1635 = vpop.trf.xlu0
        %v1636 = vpop.trf.xlu0
        %v1637 = vpop.trf.xlu0
        %v1638 = vpop.trf.xlu0
        %v1639 = vpop.trf.xlu0
        %v1640 = vpop.trf.xlu0
        %v1641 = vpop.trf.xlu0
        %v1642 = vpop.trf.xlu0
        %1643 = vxpose.xlu0.b32.start [1/16] %v1542, 128
        %1644 = vxpose.xlu0.b32.cont [2/16] %v1544, 128
        %1645 = vxpose.xlu0.b32.cont [3/16] %v1547, 128
        %1646 = vxpose.xlu0.b32.cont [4/16] %v1549, 128
        %1647 = vxpose.xlu0.b32.cont [5/16] 0.0, 128
        %1648 = vxpose.xlu0.b32.cont [6/16] 0.0, 128
        %1649 = vxpose.xlu0.b32.cont [7/16] 0.0, 128
        %1650 = vxpose.xlu0.b32.cont [8/16] 0.0, 128
        %1651 = vxpose.xlu0.b32.cont [9/16] 0.0, 128
        %1652 = vxpose.xlu0.b32.cont [10/16] 0.0, 128
        %1653 = vxpose.xlu0.b32.cont [11/16] 0.0, 128
        %1654 = vxpose.xlu0.b32.cont [12/16] 0.0, 128
        %1655 = vxpose.xlu0.b32.cont [13/16] 0.0, 128
        %1656 = vxpose.xlu0.b32.cont [14/16] 0.0, 128
        %1657 = vxpose.xlu0.b32.cont [15/16] 0.0, 128
        %1658 = vxpose.xlu0.b32.end [16/16] 0.0, 128
        %v1659 = vpop.trf.xlu0
        %v1660 = vpop.trf.xlu0
        %v1661 = vpop.trf.xlu0
        %v1662 = vpop.trf.xlu0
        %v1663 = vpop.trf.xlu0
        %v1664 = vpop.trf.xlu0
        %v1665 = vpop.trf.xlu0
        %v1666 = vpop.trf.xlu0
        %v1667 = vpop.trf.xlu0
        %v1668 = vpop.trf.xlu0
        %v1669 = vpop.trf.xlu0
        %v1670 = vpop.trf.xlu0
        %v1671 = vpop.trf.xlu0
        %v1672 = vpop.trf.xlu0
        %v1673 = vpop.trf.xlu0
        %v1674 = vpop.trf.xlu0
        %1675 = vxpose.xlu0.b32.start [1/16] %v1552, 128
        %1676 = vxpose.xlu0.b32.cont [2/16] %v1554, 128
        %1677 = vxpose.xlu0.b32.cont [3/16] %v1557, 128
        %1678 = vxpose.xlu0.b32.cont [4/16] %v1559, 128
        %1679 = vxpose.xlu0.b32.cont [5/16] 0.0, 128
        %1680 = vxpose.xlu0.b32.cont [6/16] 0.0, 128
        %1681 = vxpose.xlu0.b32.cont [7/16] 0.0, 128
        %1682 = vxpose.xlu0.b32.cont [8/16] 0.0, 128
        %1683 = vxpose.xlu0.b32.cont [9/16] 0.0, 128
        %1684 = vxpose.xlu0.b32.cont [10/16] 0.0, 128
        %1685 = vxpose.xlu0.b32.cont [11/16] 0.0, 128
        %1686 = vxpose.xlu0.b32.cont [12/16] 0.0, 128
        %1687 = vxpose.xlu0.b32.cont [13/16] 0.0, 128
        %1688 = vxpose.xlu0.b32.cont [14/16] 0.0, 128
        %1689 = vxpose.xlu0.b32.cont [15/16] 0.0, 128
        %1690 = vxpose.xlu0.b32.end [16/16] 0.0, 128
        %v1691 = vpop.trf.xlu0
        %v1692 = vpop.trf.xlu0
        %v1693 = vpop.trf.xlu0
        %v1694 = vpop.trf.xlu0
        %v1695 = vpop.trf.xlu0
        %v1696 = vpop.trf.xlu0
        %v1697 = vpop.trf.xlu0
        %v1698 = vpop.trf.xlu0
        %v1699 = vpop.trf.xlu0
        %v1700 = vpop.trf.xlu0
        %v1701 = vpop.trf.xlu0
        %v1702 = vpop.trf.xlu0
        %v1703 = vpop.trf.xlu0
        %v1704 = vpop.trf.xlu0
        %v1705 = vpop.trf.xlu0
        %v1706 = vpop.trf.xlu0
        %1707 = vxpose.xlu0.b32.start [1/16] %v1562, 128
        %1708 = vxpose.xlu0.b32.cont [2/16] %v1564, 128
        %1709 = vxpose.xlu0.b32.cont [3/16] %v1567, 128
        %1710 = vxpose.xlu0.b32.cont [4/16] %v1569, 128
        %1711 = vxpose.xlu0.b32.cont [5/16] 0.0, 128
        %1712 = vxpose.xlu0.b32.cont [6/16] 0.0, 128
        %1713 = vxpose.xlu0.b32.cont [7/16] 0.0, 128
        %1714 = vxpose.xlu0.b32.cont [8/16] 0.0, 128
        %1715 = vxpose.xlu0.b32.cont [9/16] 0.0, 128
        %1716 = vxpose.xlu0.b32.cont [10/16] 0.0, 128
        %1717 = vxpose.xlu0.b32.cont [11/16] 0.0, 128
        %1718 = vxpose.xlu0.b32.cont [12/16] 0.0, 128
        %1719 = vxpose.xlu0.b32.cont [13/16] 0.0, 128
        %1720 = vxpose.xlu0.b32.cont [14/16] 0.0, 128
        %1721 = vxpose.xlu0.b32.cont [15/16] 0.0, 128
        %1722 = vxpose.xlu0.b32.end [16/16] 0.0, 128
        %v1723 = vpop.trf.xlu0
        %v1724 = vpop.trf.xlu0
        %v1725 = vpop.trf.xlu0
        %v1726 = vpop.trf.xlu0
        %v1727 = vpop.trf.xlu0
        %v1728 = vpop.trf.xlu0
        %v1729 = vpop.trf.xlu0
        %v1730 = vpop.trf.xlu0
        %v1731 = vpop.trf.xlu0
        %v1732 = vpop.trf.xlu0
        %v1733 = vpop.trf.xlu0
        %v1734 = vpop.trf.xlu0
        %v1735 = vpop.trf.xlu0
        %v1736 = vpop.trf.xlu0
        %v1737 = vpop.trf.xlu0
        %v1738 = vpop.trf.xlu0
        %1739 = vxpose.xlu0.b32.start [1/16] %v1572, 128
        %1740 = vxpose.xlu0.b32.cont [2/16] %v1574, 128
        %1741 = vxpose.xlu0.b32.cont [3/16] %v1577, 128
        %1742 = vxpose.xlu0.b32.cont [4/16] %v1579, 128
        %1743 = vxpose.xlu0.b32.cont [5/16] 0.0, 128
        %1744 = vxpose.xlu0.b32.cont [6/16] 0.0, 128
        %1745 = vxpose.xlu0.b32.cont [7/16] 0.0, 128
        %1746 = vxpose.xlu0.b32.cont [8/16] 0.0, 128
        %1747 = vxpose.xlu0.b32.cont [9/16] 0.0, 128
        %1748 = vxpose.xlu0.b32.cont [10/16] 0.0, 128
        %1749 = vxpose.xlu0.b32.cont [11/16] 0.0, 128
        %1750 = vxpose.xlu0.b32.cont [12/16] 0.0, 128
        %1751 = vxpose.xlu0.b32.cont [13/16] 0.0, 128
        %1752 = vxpose.xlu0.b32.cont [14/16] 0.0, 128
        %1753 = vxpose.xlu0.b32.cont [15/16] 0.0, 128
        %1754 = vxpose.xlu0.b32.end [16/16] 0.0, 128
        %v1755 = vpop.trf.xlu0
        %v1756 = vpop.trf.xlu0
        %v1757 = vpop.trf.xlu0
        %v1758 = vpop.trf.xlu0
        %v1759 = vpop.trf.xlu0
        %v1760 = vpop.trf.xlu0
        %v1761 = vpop.trf.xlu0
        %v1762 = vpop.trf.xlu0
        %v1763 = vpop.trf.xlu0
        %v1764 = vpop.trf.xlu0
        %v1765 = vpop.trf.xlu0
        %v1766 = vpop.trf.xlu0
        %v1767 = vpop.trf.xlu0
        %v1768 = vpop.trf.xlu0
        %v1769 = vpop.trf.xlu0
        %v1770 = vpop.trf.xlu0
        %1771 = vxpose.xlu0.b32.start [1/16] %v1582, 128
        %1772 = vxpose.xlu0.b32.cont [2/16] %v1584, 128
        %1773 = vxpose.xlu0.b32.cont [3/16] %v1587, 128
        %1774 = vxpose.xlu0.b32.cont [4/16] %v1589, 128
        %1775 = vxpose.xlu0.b32.cont [5/16] 0.0, 128
        %1776 = vxpose.xlu0.b32.cont [6/16] 0.0, 128
        %1777 = vxpose.xlu0.b32.cont [7/16] 0.0, 128
        %1778 = vxpose.xlu0.b32.cont [8/16] 0.0, 128
        %1779 = vxpose.xlu0.b32.cont [9/16] 0.0, 128
        %1780 = vxpose.xlu0.b32.cont [10/16] 0.0, 128
        %1781 = vxpose.xlu0.b32.cont [11/16] 0.0, 128
        %1782 = vxpose.xlu0.b32.cont [12/16] 0.0, 128
        %1783 = vxpose.xlu0.b32.cont [13/16] 0.0, 128
        %1784 = vxpose.xlu0.b32.cont [14/16] 0.0, 128
        %1785 = vxpose.xlu0.b32.cont [15/16] 0.0, 128
        %1786 = vxpose.xlu0.b32.end [16/16] 0.0, 128
        %v1787 = vpop.trf.xlu0
        %v1788 = vpop.trf.xlu0
        %v1789 = vpop.trf.xlu0
        %v1790 = vpop.trf.xlu0
        %v1791 = vpop.trf.xlu0
        %v1792 = vpop.trf.xlu0
        %v1793 = vpop.trf.xlu0
        %v1794 = vpop.trf.xlu0
        %v1795 = vpop.trf.xlu0
        %v1796 = vpop.trf.xlu0
        %v1797 = vpop.trf.xlu0
        %v1798 = vpop.trf.xlu0
        %v1799 = vpop.trf.xlu0
        %v1800 = vpop.trf.xlu0
        %v1801 = vpop.trf.xlu0
        %v1802 = vpop.trf.xlu0
        %1803 = vxpose.xlu0.b32.start [1/16] %v1592, 128
        %1804 = vxpose.xlu0.b32.cont [2/16] %v1594, 128
        %1805 = vxpose.xlu0.b32.cont [3/16] %v1597, 128
        %1806 = vxpose.xlu0.b32.cont [4/16] %v1599, 128
        %1807 = vxpose.xlu0.b32.cont [5/16] 0.0, 128
        %1808 = vxpose.xlu0.b32.cont [6/16] 0.0, 128
        %1809 = vxpose.xlu0.b32.cont [7/16] 0.0, 128
        %1810 = vxpose.xlu0.b32.cont [8/16] 0.0, 128
        %1811 = vxpose.xlu0.b32.cont [9/16] 0.0, 128
        %1812 = vxpose.xlu0.b32.cont [10/16] 0.0, 128
        %1813 = vxpose.xlu0.b32.cont [11/16] 0.0, 128
        %1814 = vxpose.xlu0.b32.cont [12/16] 0.0, 128
        %1815 = vxpose.xlu0.b32.cont [13/16] 0.0, 128
        %1816 = vxpose.xlu0.b32.cont [14/16] 0.0, 128
        %1817 = vxpose.xlu0.b32.cont [15/16] 0.0, 128
        %1818 = vxpose.xlu0.b32.end [16/16] 0.0, 128
        %v1819 = vpop.trf.xlu0
        %v1820 = vpop.trf.xlu0
        %v1821 = vpop.trf.xlu0
        %v1822 = vpop.trf.xlu0
        %v1823 = vpop.trf.xlu0
        %v1824 = vpop.trf.xlu0
        %v1825 = vpop.trf.xlu0
        %v1826 = vpop.trf.xlu0
        %v1827 = vpop.trf.xlu0
        %v1828 = vpop.trf.xlu0
        %v1829 = vpop.trf.xlu0
        %v1830 = vpop.trf.xlu0
        %v1831 = vpop.trf.xlu0
        %v1832 = vpop.trf.xlu0
        %v1833 = vpop.trf.xlu0
        %v1834 = vpop.trf.xlu0
        %1835 = vxpose.xlu0.b32.start [1/16] %v1602, 128
        %1836 = vxpose.xlu0.b32.cont [2/16] %v1604, 128
        %1837 = vxpose.xlu0.b32.cont [3/16] %v1607, 128
        %1838 = vxpose.xlu0.b32.cont [4/16] %v1609, 128
        %1839 = vxpose.xlu0.b32.cont [5/16] 0.0, 128
        %1840 = vxpose.xlu0.b32.cont [6/16] 0.0, 128
        %1841 = vxpose.xlu0.b32.cont [7/16] 0.0, 128
        %1842 = vxpose.xlu0.b32.cont [8/16] 0.0, 128
        %1843 = vxpose.xlu0.b32.cont [9/16] 0.0, 128
        %1844 = vxpose.xlu0.b32.cont [10/16] 0.0, 128
        %1845 = vxpose.xlu0.b32.cont [11/16] 0.0, 128
        %1846 = vxpose.xlu0.b32.cont [12/16] 0.0, 128
        %1847 = vxpose.xlu0.b32.cont [13/16] 0.0, 128
        %1848 = vxpose.xlu0.b32.cont [14/16] 0.0, 128
        %1849 = vxpose.xlu0.b32.cont [15/16] 0.0, 128
        %1850 = vxpose.xlu0.b32.end [16/16] 0.0, 128
        %v1851 = vpop.trf.xlu0
        %v1852 = vpop.trf.xlu0
        %v1853 = vpop.trf.xlu0
        %v1854 = vpop.trf.xlu0
        %v1855 = vpop.trf.xlu0
        %v1856 = vpop.trf.xlu0
        %v1857 = vpop.trf.xlu0
        %v1858 = vpop.trf.xlu0
        %v1859 = vpop.trf.xlu0
        %v1860 = vpop.trf.xlu0
        %v1861 = vpop.trf.xlu0
        %v1862 = vpop.trf.xlu0
        %v1863 = vpop.trf.xlu0
        %v1864 = vpop.trf.xlu0
        %v1865 = vpop.trf.xlu0
        %v1866 = vpop.trf.xlu0
        %v1867 = vpack.c.bf16 %v1628, %v1627
        %v1868 = vpack.c.bf16 %v1660, %v1659
        %v1869 = vpack.c.bf16 %v1692, %v1691
        %v1870 = vpack.c.bf16 %v1724, %v1723
        %v1871 = vpack.c.bf16 %v1756, %v1755
        %v1872 = vpack.c.bf16 %v1788, %v1787
        %v1873 = vpack.c.bf16 %v1820, %v1819
        %v1874 = vpack.c.bf16 %v1852, %v1851
        %v1876 = vsel %vm490, %v1867, 0
        %v1879 = vsel %vm490, %v1868, 0
        %v1882 = vsel %vm490, %v1869, 0
        %v1885 = vsel %vm490, %v1870, 0
        %v1888 = vsel %vm490, %v1871, 0
        %v1891 = vsel %vm490, %v1872, 0
        %v1894 = vsel %vm490, %v1873, 0
        %v1897 = vsel %vm490, %v1874, 0
        %1899 = vmatpush.bf16.msra.mxu0 0
        %1900 = vmatpush.bf16.msra.mxu0 0
        %1901 = vmatpush.bf16.msra.mxu0 0
        %1902 = vmatpush.bf16.msra.mxu0 0
        %1903 = vmatpush.bf16.msra.mxu0 0
        %1904 = vmatpush.bf16.msra.mxu0 0
        %1905 = vmatpush.bf16.msra.mxu0 %v901
        %1906 = vmatpush.bf16.msra.mxu0 %v900
        %1907 = vmatmul.bf16.gmra.mxu0 %v1876
        %v1908 = vpop.f32.mrf.mxu0
        %v1909 = vadd.f32 0.0, %v1908
        %v1910 = vpop.f32.mrf.mxu0
        %v1911 = vadd.f32 0.0, %v1910
        %1912 = vmatmul.bf16.gmra.mxu0 %v1879
        %v1913 = vpop.f32.mrf.mxu0
        %v1914 = vadd.f32 0.0, %v1913
        %v1915 = vpop.f32.mrf.mxu0
        %v1916 = vadd.f32 0.0, %v1915
        %1917 = vmatmul.bf16.gmra.mxu0 %v1882
        %v1918 = vpop.f32.mrf.mxu0
        %v1919 = vadd.f32 0.0, %v1918
        %v1920 = vpop.f32.mrf.mxu0
        %v1921 = vadd.f32 0.0, %v1920
        %1922 = vmatmul.bf16.gmra.mxu0 %v1885
        %v1923 = vpop.f32.mrf.mxu0
        %v1924 = vadd.f32 0.0, %v1923
        %v1925 = vpop.f32.mrf.mxu0
        %v1926 = vadd.f32 0.0, %v1925
        %1927 = vmatmul.bf16.gmra.mxu0 %v1888
        %v1928 = vpop.f32.mrf.mxu0
        %v1929 = vadd.f32 0.0, %v1928
        %v1930 = vpop.f32.mrf.mxu0
        %v1931 = vadd.f32 0.0, %v1930
        %1932 = vmatmul.bf16.gmra.mxu0 %v1891
        %v1933 = vpop.f32.mrf.mxu0
        %v1934 = vadd.f32 0.0, %v1933
        %v1935 = vpop.f32.mrf.mxu0
        %v1936 = vadd.f32 0.0, %v1935
        %1937 = vmatmul.bf16.gmra.mxu0 %v1894
        %v1938 = vpop.f32.mrf.mxu0
        %v1939 = vadd.f32 0.0, %v1938
        %v1940 = vpop.f32.mrf.mxu0
        %v1941 = vadd.f32 0.0, %v1940
        %1942 = vmatmul.bf16.gmra.mxu0 %v1897
        %v1943 = vpop.f32.mrf.mxu0
        %v1944 = vadd.f32 0.0, %v1943
        %v1945 = vpop.f32.mrf.mxu0
        %v1946 = vadd.f32 0.0, %v1945
        %1947 = vdwg.mxu0
        %1948 = vxpose.xlu0.b32.start [1/16] %v1909, 128
        %1949 = vxpose.xlu0.b32.cont [2/16] %v1911, 128
        %1950 = vxpose.xlu0.b32.cont [3/16] 0.0, 128
        %1951 = vxpose.xlu0.b32.cont [4/16] 0.0, 128
        %1952 = vxpose.xlu0.b32.cont [5/16] 0.0, 128
        %1953 = vxpose.xlu0.b32.cont [6/16] 0.0, 128
        %1954 = vxpose.xlu0.b32.cont [7/16] 0.0, 128
        %1955 = vxpose.xlu0.b32.cont [8/16] 0.0, 128
        %1956 = vxpose.xlu0.b32.cont [9/16] 0.0, 128
        %1957 = vxpose.xlu0.b32.cont [10/16] 0.0, 128
        %1958 = vxpose.xlu0.b32.cont [11/16] 0.0, 128
        %1959 = vxpose.xlu0.b32.cont [12/16] 0.0, 128
        %1960 = vxpose.xlu0.b32.cont [13/16] 0.0, 128
        %1961 = vxpose.xlu0.b32.cont [14/16] 0.0, 128
        %1962 = vxpose.xlu0.b32.cont [15/16] 0.0, 128
        %1963 = vxpose.xlu0.b32.end [16/16] 0.0, 128
        %v1964 = vpop.trf.xlu0
        %v1965 = vpop.trf.xlu0
        %v1966 = vpop.trf.xlu0
        %v1967 = vpop.trf.xlu0
        %v1968 = vpop.trf.xlu0
        %v1969 = vpop.trf.xlu0
        %v1970 = vpop.trf.xlu0
        %v1971 = vpop.trf.xlu0
        %v1972 = vpop.trf.xlu0
        %v1973 = vpop.trf.xlu0
        %v1974 = vpop.trf.xlu0
        %v1975 = vpop.trf.xlu0
        %v1976 = vpop.trf.xlu0
        %v1977 = vpop.trf.xlu0
        %v1978 = vpop.trf.xlu0
        %v1979 = vpop.trf.xlu0
        %1980 = vxpose.xlu0.b32.start [1/16] %v1914, 128
        %1981 = vxpose.xlu0.b32.cont [2/16] %v1916, 128
        %1982 = vxpose.xlu0.b32.cont [3/16] 0.0, 128
        %1983 = vxpose.xlu0.b32.cont [4/16] 0.0, 128
        %1984 = vxpose.xlu0.b32.cont [5/16] 0.0, 128
        %1985 = vxpose.xlu0.b32.cont [6/16] 0.0, 128
        %1986 = vxpose.xlu0.b32.cont [7/16] 0.0, 128
        %1987 = vxpose.xlu0.b32.cont [8/16] 0.0, 128
        %1988 = vxpose.xlu0.b32.cont [9/16] 0.0, 128
        %1989 = vxpose.xlu0.b32.cont [10/16] 0.0, 128
        %1990 = vxpose.xlu0.b32.cont [11/16] 0.0, 128
        %1991 = vxpose.xlu0.b32.cont [12/16] 0.0, 128
        %1992 = vxpose.xlu0.b32.cont [13/16] 0.0, 128
        %1993 = vxpose.xlu0.b32.cont [14/16] 0.0, 128
        %1994 = vxpose.xlu0.b32.cont [15/16] 0.0, 128
        %1995 = vxpose.xlu0.b32.end [16/16] 0.0, 128
        %v1996 = vpop.trf.xlu0
        %v1997 = vpop.trf.xlu0
        %v1998 = vpop.trf.xlu0
        %v1999 = vpop.trf.xlu0
        %v2000 = vpop.trf.xlu0
        %v2001 = vpop.trf.xlu0
        %v2002 = vpop.trf.xlu0
        %v2003 = vpop.trf.xlu0
        %v2004 = vpop.trf.xlu0
        %v2005 = vpop.trf.xlu0
        %v2006 = vpop.trf.xlu0
        %v2007 = vpop.trf.xlu0
        %v2008 = vpop.trf.xlu0
        %v2009 = vpop.trf.xlu0
        %v2010 = vpop.trf.xlu0
        %v2011 = vpop.trf.xlu0
        %2012 = vxpose.xlu0.b32.start [1/16] %v1919, 128
        %2013 = vxpose.xlu0.b32.cont [2/16] %v1921, 128
        %2014 = vxpose.xlu0.b32.cont [3/16] 0.0, 128
        %2015 = vxpose.xlu0.b32.cont [4/16] 0.0, 128
        %2016 = vxpose.xlu0.b32.cont [5/16] 0.0, 128
        %2017 = vxpose.xlu0.b32.cont [6/16] 0.0, 128
        %2018 = vxpose.xlu0.b32.cont [7/16] 0.0, 128
        %2019 = vxpose.xlu0.b32.cont [8/16] 0.0, 128
        %2020 = vxpose.xlu0.b32.cont [9/16] 0.0, 128
        %2021 = vxpose.xlu0.b32.cont [10/16] 0.0, 128
        %2022 = vxpose.xlu0.b32.cont [11/16] 0.0, 128
        %2023 = vxpose.xlu0.b32.cont [12/16] 0.0, 128
        %2024 = vxpose.xlu0.b32.cont [13/16] 0.0, 128
        %2025 = vxpose.xlu0.b32.cont [14/16] 0.0, 128
        %2026 = vxpose.xlu0.b32.cont [15/16] 0.0, 128
        %2027 = vxpose.xlu0.b32.end [16/16] 0.0, 128
        %v2028 = vpop.trf.xlu0
        %v2029 = vpop.trf.xlu0
        %v2030 = vpop.trf.xlu0
        %v2031 = vpop.trf.xlu0
        %v2032 = vpop.trf.xlu0
        %v2033 = vpop.trf.xlu0
        %v2034 = vpop.trf.xlu0
        %v2035 = vpop.trf.xlu0
        %v2036 = vpop.trf.xlu0
        %v2037 = vpop.trf.xlu0
        %v2038 = vpop.trf.xlu0
        %v2039 = vpop.trf.xlu0
        %v2040 = vpop.trf.xlu0
        %v2041 = vpop.trf.xlu0
        %v2042 = vpop.trf.xlu0
        %v2043 = vpop.trf.xlu0
        %2044 = vxpose.xlu0.b32.start [1/16] %v1924, 128
        %2045 = vxpose.xlu0.b32.cont [2/16] %v1926, 128
        %2046 = vxpose.xlu0.b32.cont [3/16] 0.0, 128
        %2047 = vxpose.xlu0.b32.cont [4/16] 0.0, 128
        %2048 = vxpose.xlu0.b32.cont [5/16] 0.0, 128
        %2049 = vxpose.xlu0.b32.cont [6/16] 0.0, 128
        %2050 = vxpose.xlu0.b32.cont [7/16] 0.0, 128
        %2051 = vxpose.xlu0.b32.cont [8/16] 0.0, 128
        %2052 = vxpose.xlu0.b32.cont [9/16] 0.0, 128
        %2053 = vxpose.xlu0.b32.cont [10/16] 0.0, 128
        %2054 = vxpose.xlu0.b32.cont [11/16] 0.0, 128
        %2055 = vxpose.xlu0.b32.cont [12/16] 0.0, 128
        %2056 = vxpose.xlu0.b32.cont [13/16] 0.0, 128
        %2057 = vxpose.xlu0.b32.cont [14/16] 0.0, 128
        %2058 = vxpose.xlu0.b32.cont [15/16] 0.0, 128
        %2059 = vxpose.xlu0.b32.end [16/16] 0.0, 128
        %v2060 = vpop.trf.xlu0
        %v2061 = vpop.trf.xlu0
        %v2062 = vpop.trf.xlu0
        %v2063 = vpop.trf.xlu0
        %v2064 = vpop.trf.xlu0
        %v2065 = vpop.trf.xlu0
        %v2066 = vpop.trf.xlu0
        %v2067 = vpop.trf.xlu0
        %v2068 = vpop.trf.xlu0
        %v2069 = vpop.trf.xlu0
        %v2070 = vpop.trf.xlu0
        %v2071 = vpop.trf.xlu0
        %v2072 = vpop.trf.xlu0
        %v2073 = vpop.trf.xlu0
        %v2074 = vpop.trf.xlu0
        %v2075 = vpop.trf.xlu0
        %2076 = vxpose.xlu0.b32.start [1/16] %v1929, 128
        %2077 = vxpose.xlu0.b32.cont [2/16] %v1931, 128
        %2078 = vxpose.xlu0.b32.cont [3/16] 0.0, 128
        %2079 = vxpose.xlu0.b32.cont [4/16] 0.0, 128
        %2080 = vxpose.xlu0.b32.cont [5/16] 0.0, 128
        %2081 = vxpose.xlu0.b32.cont [6/16] 0.0, 128
        %2082 = vxpose.xlu0.b32.cont [7/16] 0.0, 128
        %2083 = vxpose.xlu0.b32.cont [8/16] 0.0, 128
        %2084 = vxpose.xlu0.b32.cont [9/16] 0.0, 128
        %2085 = vxpose.xlu0.b32.cont [10/16] 0.0, 128
        %2086 = vxpose.xlu0.b32.cont [11/16] 0.0, 128
        %2087 = vxpose.xlu0.b32.cont [12/16] 0.0, 128
        %2088 = vxpose.xlu0.b32.cont [13/16] 0.0, 128
        %2089 = vxpose.xlu0.b32.cont [14/16] 0.0, 128
        %2090 = vxpose.xlu0.b32.cont [15/16] 0.0, 128
        %2091 = vxpose.xlu0.b32.end [16/16] 0.0, 128
        %v2092 = vpop.trf.xlu0
        %v2093 = vpop.trf.xlu0
        %v2094 = vpop.trf.xlu0
        %v2095 = vpop.trf.xlu0
        %v2096 = vpop.trf.xlu0
        %v2097 = vpop.trf.xlu0
        %v2098 = vpop.trf.xlu0
        %v2099 = vpop.trf.xlu0
        %v2100 = vpop.trf.xlu0
        %v2101 = vpop.trf.xlu0
        %v2102 = vpop.trf.xlu0
        %v2103 = vpop.trf.xlu0
        %v2104 = vpop.trf.xlu0
        %v2105 = vpop.trf.xlu0
        %v2106 = vpop.trf.xlu0
        %v2107 = vpop.trf.xlu0
        %2108 = vxpose.xlu0.b32.start [1/16] %v1934, 128
        %2109 = vxpose.xlu0.b32.cont [2/16] %v1936, 128
        %2110 = vxpose.xlu0.b32.cont [3/16] 0.0, 128
        %2111 = vxpose.xlu0.b32.cont [4/16] 0.0, 128
        %2112 = vxpose.xlu0.b32.cont [5/16] 0.0, 128
        %2113 = vxpose.xlu0.b32.cont [6/16] 0.0, 128
        %2114 = vxpose.xlu0.b32.cont [7/16] 0.0, 128
        %2115 = vxpose.xlu0.b32.cont [8/16] 0.0, 128
        %2116 = vxpose.xlu0.b32.cont [9/16] 0.0, 128
        %2117 = vxpose.xlu0.b32.cont [10/16] 0.0, 128
        %2118 = vxpose.xlu0.b32.cont [11/16] 0.0, 128
        %2119 = vxpose.xlu0.b32.cont [12/16] 0.0, 128
        %2120 = vxpose.xlu0.b32.cont [13/16] 0.0, 128
        %2121 = vxpose.xlu0.b32.cont [14/16] 0.0, 128
        %2122 = vxpose.xlu0.b32.cont [15/16] 0.0, 128
        %2123 = vxpose.xlu0.b32.end [16/16] 0.0, 128
        %v2124 = vpop.trf.xlu0
        %v2125 = vpop.trf.xlu0
        %v2126 = vpop.trf.xlu0
        %v2127 = vpop.trf.xlu0
        %v2128 = vpop.trf.xlu0
        %v2129 = vpop.trf.xlu0
        %v2130 = vpop.trf.xlu0
        %v2131 = vpop.trf.xlu0
        %v2132 = vpop.trf.xlu0
        %v2133 = vpop.trf.xlu0
        %v2134 = vpop.trf.xlu0
        %v2135 = vpop.trf.xlu0
        %v2136 = vpop.trf.xlu0
        %v2137 = vpop.trf.xlu0
        %v2138 = vpop.trf.xlu0
        %v2139 = vpop.trf.xlu0
        %2140 = vxpose.xlu0.b32.start [1/16] %v1939, 128
        %2141 = vxpose.xlu0.b32.cont [2/16] %v1941, 128
        %2142 = vxpose.xlu0.b32.cont [3/16] 0.0, 128
        %2143 = vxpose.xlu0.b32.cont [4/16] 0.0, 128
        %2144 = vxpose.xlu0.b32.cont [5/16] 0.0, 128
        %2145 = vxpose.xlu0.b32.cont [6/16] 0.0, 128
        %2146 = vxpose.xlu0.b32.cont [7/16] 0.0, 128
        %2147 = vxpose.xlu0.b32.cont [8/16] 0.0, 128
        %2148 = vxpose.xlu0.b32.cont [9/16] 0.0, 128
        %2149 = vxpose.xlu0.b32.cont [10/16] 0.0, 128
        %2150 = vxpose.xlu0.b32.cont [11/16] 0.0, 128
        %2151 = vxpose.xlu0.b32.cont [12/16] 0.0, 128
        %2152 = vxpose.xlu0.b32.cont [13/16] 0.0, 128
        %2153 = vxpose.xlu0.b32.cont [14/16] 0.0, 128
        %2154 = vxpose.xlu0.b32.cont [15/16] 0.0, 128
        %2155 = vxpose.xlu0.b32.end [16/16] 0.0, 128
        %v2156 = vpop.trf.xlu0
        %v2157 = vpop.trf.xlu0
        %v2158 = vpop.trf.xlu0
        %v2159 = vpop.trf.xlu0
        %v2160 = vpop.trf.xlu0
        %v2161 = vpop.trf.xlu0
        %v2162 = vpop.trf.xlu0
        %v2163 = vpop.trf.xlu0
        %v2164 = vpop.trf.xlu0
        %v2165 = vpop.trf.xlu0
        %v2166 = vpop.trf.xlu0
        %v2167 = vpop.trf.xlu0
        %v2168 = vpop.trf.xlu0
        %v2169 = vpop.trf.xlu0
        %v2170 = vpop.trf.xlu0
        %v2171 = vpop.trf.xlu0
        %2172 = vxpose.xlu0.b32.start [1/16] %v1944, 128
        %2173 = vxpose.xlu0.b32.cont [2/16] %v1946, 128
        %2174 = vxpose.xlu0.b32.cont [3/16] 0.0, 128
        %2175 = vxpose.xlu0.b32.cont [4/16] 0.0, 128
        %2176 = vxpose.xlu0.b32.cont [5/16] 0.0, 128
        %2177 = vxpose.xlu0.b32.cont [6/16] 0.0, 128
        %2178 = vxpose.xlu0.b32.cont [7/16] 0.0, 128
        %2179 = vxpose.xlu0.b32.cont [8/16] 0.0, 128
        %2180 = vxpose.xlu0.b32.cont [9/16] 0.0, 128
        %2181 = vxpose.xlu0.b32.cont [10/16] 0.0, 128
        %2182 = vxpose.xlu0.b32.cont [11/16] 0.0, 128
        %2183 = vxpose.xlu0.b32.cont [12/16] 0.0, 128
        %2184 = vxpose.xlu0.b32.cont [13/16] 0.0, 128
        %2185 = vxpose.xlu0.b32.cont [14/16] 0.0, 128
        %2186 = vxpose.xlu0.b32.cont [15/16] 0.0, 128
        %2187 = vxpose.xlu0.b32.end [16/16] 0.0, 128
        %v2188 = vpop.trf.xlu0
        %v2189 = vpop.trf.xlu0
        %v2190 = vpop.trf.xlu0
        %v2191 = vpop.trf.xlu0
        %v2192 = vpop.trf.xlu0
        %v2193 = vpop.trf.xlu0
        %v2194 = vpop.trf.xlu0
        %v2195 = vpop.trf.xlu0
        %v2196 = vpop.trf.xlu0
        %v2197 = vpop.trf.xlu0
        %v2198 = vpop.trf.xlu0
        %v2199 = vpop.trf.xlu0
        %v2200 = vpop.trf.xlu0
        %v2201 = vpop.trf.xlu0
        %v2202 = vpop.trf.xlu0
        %v2203 = vpop.trf.xlu0
        %v2204 = vpack.c.bf16 %v1964, %v1964
        %v2205 = vpack.c.bf16 %v1965, %v1965
        %v2206 = vpack.c.bf16 %v1996, %v1996
        %v2207 = vpack.c.bf16 %v1997, %v1997
        %v2208 = vpack.c.bf16 %v2028, %v2028
        %v2209 = vpack.c.bf16 %v2029, %v2029
        %v2210 = vpack.c.bf16 %v2060, %v2060
        %v2211 = vpack.c.bf16 %v2061, %v2061
        %v2212 = vpack.c.bf16 %v2092, %v2092
        %v2213 = vpack.c.bf16 %v2093, %v2093
        %v2214 = vpack.c.bf16 %v2124, %v2124
        %v2215 = vpack.c.bf16 %v2125, %v2125
        %v2216 = vpack.c.bf16 %v2156, %v2156
        %v2217 = vpack.c.bf16 %v2157, %v2157
        %v2218 = vpack.c.bf16 %v2188, %v2188
        %v2219 = vpack.c.bf16 %v2189, %v2189
        %s2220 = scalar_lea.vmem %s257, 64 [#allocation6]
        %2221 = vst.msk [vmem:[%s2220] sm:$0xf] %vm1249, %v2204
        %2222 = vst.msk [vmem:[%s2220 + $0x4] sm:$0xf] %vm1249, %v2205
        %2223 = vst.msk [vmem:[%s2220 + $0x8] sm:$0xf] %vm1249, %v2206
        %2224 = vst.msk [vmem:[%s2220 + $0xc] sm:$0xf] %vm1249, %v2207
        %2225 = vst.msk [vmem:[%s2220 + $0x10] sm:$0xf] %vm1249, %v2208
        %2226 = vst.msk [vmem:[%s2220 + $0x14] sm:$0xf] %vm1249, %v2209
        %2227 = vst.msk [vmem:[%s2220 + $0x18] sm:$0xf] %vm1249, %v2210
        %2228 = vst.msk [vmem:[%s2220 + $0x1c] sm:$0xf] %vm1249, %v2211
        %2229 = vst.msk [vmem:[%s2220 + $0x20] sm:$0xf] %vm1249, %v2212
        %2230 = vst.msk [vmem:[%s2220 + $0x24] sm:$0xf] %vm1249, %v2213
        %2231 = vst.msk [vmem:[%s2220 + $0x28] sm:$0xf] %vm1249, %v2214
        %2232 = vst.msk [vmem:[%s2220 + $0x2c] sm:$0xf] %vm1249, %v2215
        %2233 = vst.msk [vmem:[%s2220 + $0x30] sm:$0xf] %vm1249, %v2216
        %2234 = vst.msk [vmem:[%s2220 + $0x34] sm:$0xf] %vm1249, %v2217
        %2235 = vst.msk [vmem:[%s2220 + $0x38] sm:$0xf] %vm1249, %v2218
        %2236 = vst.msk [vmem:[%s2220 + $0x3c] sm:$0xf] %vm1249, %v2219
        %s2237 = sand.u32 %s123, 1
        %s2238 = sand.u32 %s123, 1
        %s2239 = smul.addr %s2238, 128
        %s2240 = scalar_lea.vmem [#allocation6], %s2239
        // Predicated region
        $region45: #{tpu_custom_call.1} parent=35 // pred_check
          %p2241 = pneg %p133
        $region46: #{tpu_custom_call.1} parent=35 // pred_check_branch
          %2243 = sbr.rel (%p2241) target = $region48
        $region47: #{tpu_custom_call.1} parent=35 // pred_region
          %s2244 = smul.u32 8, %s21
          %s2245 = smul.addr %s2244, 2
          %s2246 = smul.addr %s2245, 4
          %s2247 = scalar_lea.vmem %s4, %s2246
          // Predicated region
          $region49: #{tpu_custom_call.1} parent=47 // pred_check
            _
          $region50: #{tpu_custom_call.1} parent=47 // pred_check_branch
            %2249 = sbr.rel (0) target = $region52
          $region51: #{tpu_custom_call.1} parent=47 // pred_region
            // Predicated region
            $region53: #{tpu_custom_call.1} parent=51 // pred_check
              _
            $region54: #{tpu_custom_call.1} parent=51 // pred_check_branch
              %2251 = sbr.rel target = $region56
            $region55: #{tpu_custom_call.1} parent=51 // pred_region
              // Predicated region
              $region68: #{tpu_custom_call.1} parent=55 // pred_check
                _
              $region69: #{tpu_custom_call.1} parent=55 // pred_check_branch
                %2329 = sbr.rel (0) target = $region71
              $region70: #{tpu_custom_call.1} parent=55 // pred_region
                loop: start=0, step=1, limit=1
                $region72: #{tpu_custom_call.1} parent=70 // loop_pre_header
                  _
                $region73: #{tpu_custom_call.1} parent=70 // loop_header
                  %s2331 = sphi 0, %s2335
                  %p2332 = scmp.ge.s32.totalorder %s2331, 1
                  %s2336 = sphi %s2240, %s2240
                  %s2337 = sphi %s2247, %s2247
                $region74: #{tpu_custom_call.1} parent=70 // loop_header_branch
                  %2334 = sbr.rel (%p2332) target = $region78
                $region75: #{tpu_custom_call.1} parent=70 // loop_body
                  _
                $region76: #{tpu_custom_call.1} parent=70 // loop_footer
                  %s2335 = sadd.s32 1, %s2331
                $region77: #{tpu_custom_call.1} parent=70 // loop_footer_branch
                  %2330 = sbr.rel target = $region73
                $region78: #{tpu_custom_call.1} parent=70 // loop_exit
                  _
                %s2339 = ssub.s32 16, 1
                loop: start=0, step=1, limit=1
                $region79: #{tpu_custom_call.1} parent=70 // loop_pre_header
                  _
                $region80: #{tpu_custom_call.1} parent=70 // loop_header
                  %s2341 = sphi 0, %s2345
                  %p2342 = scmp.ge.s32.totalorder %s2341, 1
                  %s2346 = sphi %s2240, %s2240
                  %s2347 = sphi %s2247, %s2247
                $region81: #{tpu_custom_call.1} parent=70 // loop_header_branch
                  %2344 = sbr.rel (%p2342) target = $region85
                $region82: #{tpu_custom_call.1} parent=70 // loop_body
                  %v2348 = vld [vmem:[%s2346] sm:%s2339]
                  %2349 = vst [vmem:[%s2347] sm:%s2339] %v2348
                  %v2350 = vld [vmem:[%s2346 + $0x4] sm:%s2339]
                  %2351 = vst [vmem:[%s2347 + $0x4] sm:%s2339] %v2350
                  %v2352 = vld [vmem:[%s2346 + $0x8] sm:%s2339]
                  %2353 = vst [vmem:[%s2347 + $0x8] sm:%s2339] %v2352
                  %v2354 = vld [vmem:[%s2346 + $0xc] sm:%s2339]
                  %2355 = vst [vmem:[%s2347 + $0xc] sm:%s2339] %v2354
                  %v2356 = vld [vmem:[%s2346 + $0x10] sm:%s2339]
                  %2357 = vst [vmem:[%s2347 + $0x10] sm:%s2339] %v2356
                  %v2358 = vld [vmem:[%s2346 + $0x14] sm:%s2339]
                  %2359 = vst [vmem:[%s2347 + $0x14] sm:%s2339] %v2358
                  %v2360 = vld [vmem:[%s2346 + $0x18] sm:%s2339]
                  %2361 = vst [vmem:[%s2347 + $0x18] sm:%s2339] %v2360
                  %v2362 = vld [vmem:[%s2346 + $0x1c] sm:%s2339]
                  %2363 = vst [vmem:[%s2347 + $0x1c] sm:%s2339] %v2362
                  %v2364 = vld [vmem:[%s2346 + $0x20] sm:%s2339]
                  %2365 = vst [vmem:[%s2347 + $0x20] sm:%s2339] %v2364
                  %v2366 = vld [vmem:[%s2346 + $0x24] sm:%s2339]
                  %2367 = vst [vmem:[%s2347 + $0x24] sm:%s2339] %v2366
                  %v2368 = vld [vmem:[%s2346 + $0x28] sm:%s2339]
                  %2369 = vst [vmem:[%s2347 + $0x28] sm:%s2339] %v2368
                  %v2370 = vld [vmem:[%s2346 + $0x2c] sm:%s2339]
                  %2371 = vst [vmem:[%s2347 + $0x2c] sm:%s2339] %v2370
                  %v2372 = vld [vmem:[%s2346 + $0x30] sm:%s2339]
                  %2373 = vst [vmem:[%s2347 + $0x30] sm:%s2339] %v2372
                  %v2374 = vld [vmem:[%s2346 + $0x34] sm:%s2339]
                  %2375 = vst [vmem:[%s2347 + $0x34] sm:%s2339] %v2374
                  %v2376 = vld [vmem:[%s2346 + $0x38] sm:%s2339]
                  %2377 = vst [vmem:[%s2347 + $0x38] sm:%s2339] %v2376
                  %v2378 = vld [vmem:[%s2346 + $0x3c] sm:%s2339]
                  %2379 = vst [vmem:[%s2347 + $0x3c] sm:%s2339] %v2378
                  %v2380 = vld [vmem:[%s2346 + $0x40] sm:%s2339]
                  %2381 = vst [vmem:[%s2347 + $0xc0] sm:%s2339] %v2380
                  %v2382 = vld [vmem:[%s2346 + $0x44] sm:%s2339]
                  %2383 = vst [vmem:[%s2347 + $0xc4] sm:%s2339] %v2382
                  %v2384 = vld [vmem:[%s2346 + $0x48] sm:%s2339]
                  %2385 = vst [vmem:[%s2347 + $0xc8] sm:%s2339] %v2384
                  %v2386 = vld [vmem:[%s2346 + $0x4c] sm:%s2339]
                  %2387 = vst [vmem:[%s2347 + $0xcc] sm:%s2339] %v2386
                  %v2388 = vld [vmem:[%s2346 + $0x50] sm:%s2339]
                  %2389 = vst [vmem:[%s2347 + $0xd0] sm:%s2339] %v2388
                  %v2390 = vld [vmem:[%s2346 + $0x54] sm:%s2339]
                  %2391 = vst [vmem:[%s2347 + $0xd4] sm:%s2339] %v2390
                  %v2392 = vld [vmem:[%s2346 + $0x58] sm:%s2339]
                  %2393 = vst [vmem:[%s2347 + $0xd8] sm:%s2339] %v2392
                  %v2394 = vld [vmem:[%s2346 + $0x5c] sm:%s2339]
                  %2395 = vst [vmem:[%s2347 + $0xdc] sm:%s2339] %v2394
                  %v2396 = vld [vmem:[%s2346 + $0x60] sm:%s2339]
                  %2397 = vst [vmem:[%s2347 + $0xe0] sm:%s2339] %v2396
                  %v2398 = vld [vmem:[%s2346 + $0x64] sm:%s2339]
                  %2399 = vst [vmem:[%s2347 + $0xe4] sm:%s2339] %v2398
                  %v2400 = vld [vmem:[%s2346 + $0x68] sm:%s2339]
                  %2401 = vst [vmem:[%s2347 + $0xe8] sm:%s2339] %v2400
                  %v2402 = vld [vmem:[%s2346 + $0x6c] sm:%s2339]
                  %2403 = vst [vmem:[%s2347 + $0xec] sm:%s2339] %v2402
                  %v2404 = vld [vmem:[%s2346 + $0x70] sm:%s2339]
                  %2405 = vst [vmem:[%s2347 + $0xf0] sm:%s2339] %v2404
                  %v2406 = vld [vmem:[%s2346 + $0x74] sm:%s2339]
                  %2407 = vst [vmem:[%s2347 + $0xf4] sm:%s2339] %v2406
                  %v2408 = vld [vmem:[%s2346 + $0x78] sm:%s2339]
                  %2409 = vst [vmem:[%s2347 + $0xf8] sm:%s2339] %v2408
                  %v2410 = vld [vmem:[%s2346 + $0x7c] sm:%s2339]
                  %2411 = vst [vmem:[%s2347 + $0xfc] sm:%s2339] %v2410
                $region83: #{tpu_custom_call.1} parent=70 // loop_footer
                  %s2345 = sadd.s32 1, %s2341
                $region84: #{tpu_custom_call.1} parent=70 // loop_footer_branch
                  %2340 = sbr.rel target = $region80
                $region85: #{tpu_custom_call.1} parent=70 // loop_exit
                  _
              $region71: #{tpu_custom_call.1} parent=55 // pred_fallthru
                _
            $region56: #{tpu_custom_call.1} parent=51 // pred_fallthru
              _
            // Predicated region
            $region57: #{tpu_custom_call.1} parent=51 // pred_check
              _
            $region58: #{tpu_custom_call.1} parent=51 // pred_check_branch
              %2253 = sbr.rel (0) target = $region60
            $region59: #{tpu_custom_call.1} parent=51 // pred_region
              %s2255 = ssub.s32 16, 1
              loop: start=0, step=1, limit=1
              $region61: #{tpu_custom_call.1} parent=59 // loop_pre_header
                _
              $region62: #{tpu_custom_call.1} parent=59 // loop_header
                %s2257 = sphi 0, %s2261
                %p2258 = scmp.ge.s32.totalorder %s2257, 1
                %s2262 = sphi %s2240, %s2240
                %s2263 = sphi %s2247, %s2247
              $region63: #{tpu_custom_call.1} parent=59 // loop_header_branch
                %2260 = sbr.rel (%p2258) target = $region67
              $region64: #{tpu_custom_call.1} parent=59 // loop_body
                %v2264 = vld [vmem:[%s2262] sm:%s2255]
                %2265 = vst [vmem:[%s2263] sm:%s2255] %v2264
                %v2266 = vld [vmem:[%s2262 + $0x4] sm:%s2255]
                %2267 = vst [vmem:[%s2263 + $0x4] sm:%s2255] %v2266
                %v2268 = vld [vmem:[%s2262 + $0x8] sm:%s2255]
                %2269 = vst [vmem:[%s2263 + $0x8] sm:%s2255] %v2268
                %v2270 = vld [vmem:[%s2262 + $0xc] sm:%s2255]
                %2271 = vst [vmem:[%s2263 + $0xc] sm:%s2255] %v2270
                %v2272 = vld [vmem:[%s2262 + $0x10] sm:%s2255]
                %2273 = vst [vmem:[%s2263 + $0x10] sm:%s2255] %v2272
                %v2274 = vld [vmem:[%s2262 + $0x14] sm:%s2255]
                %2275 = vst [vmem:[%s2263 + $0x14] sm:%s2255] %v2274
                %v2276 = vld [vmem:[%s2262 + $0x18] sm:%s2255]
                %2277 = vst [vmem:[%s2263 + $0x18] sm:%s2255] %v2276
                %v2278 = vld [vmem:[%s2262 + $0x1c] sm:%s2255]
                %2279 = vst [vmem:[%s2263 + $0x1c] sm:%s2255] %v2278
                %v2280 = vld [vmem:[%s2262 + $0x20] sm:%s2255]
                %2281 = vst [vmem:[%s2263 + $0x20] sm:%s2255] %v2280
                %v2282 = vld [vmem:[%s2262 + $0x24] sm:%s2255]
                %2283 = vst [vmem:[%s2263 + $0x24] sm:%s2255] %v2282
                %v2284 = vld [vmem:[%s2262 + $0x28] sm:%s2255]
                %2285 = vst [vmem:[%s2263 + $0x28] sm:%s2255] %v2284
                %v2286 = vld [vmem:[%s2262 + $0x2c] sm:%s2255]
                %2287 = vst [vmem:[%s2263 + $0x2c] sm:%s2255] %v2286
                %v2288 = vld [vmem:[%s2262 + $0x30] sm:%s2255]
                %2289 = vst [vmem:[%s2263 + $0x30] sm:%s2255] %v2288
                %v2290 = vld [vmem:[%s2262 + $0x34] sm:%s2255]
                %2291 = vst [vmem:[%s2263 + $0x34] sm:%s2255] %v2290
                %v2292 = vld [vmem:[%s2262 + $0x38] sm:%s2255]
                %2293 = vst [vmem:[%s2263 + $0x38] sm:%s2255] %v2292
                %v2294 = vld [vmem:[%s2262 + $0x3c] sm:%s2255]
                %2295 = vst [vmem:[%s2263 + $0x3c] sm:%s2255] %v2294
                %v2296 = vld [vmem:[%s2262 + $0x40] sm:%s2255]
                %2297 = vst [vmem:[%s2263 + $0xc0] sm:%s2255] %v2296
                %v2298 = vld [vmem:[%s2262 + $0x44] sm:%s2255]
                %2299 = vst [vmem:[%s2263 + $0xc4] sm:%s2255] %v2298
                %v2300 = vld [vmem:[%s2262 + $0x48] sm:%s2255]
                %2301 = vst [vmem:[%s2263 + $0xc8] sm:%s2255] %v2300
                %v2302 = vld [vmem:[%s2262 + $0x4c] sm:%s2255]
                %2303 = vst [vmem:[%s2263 + $0xcc] sm:%s2255] %v2302
                %v2304 = vld [vmem:[%s2262 + $0x50] sm:%s2255]
                %2305 = vst [vmem:[%s2263 + $0xd0] sm:%s2255] %v2304
                %v2306 = vld [vmem:[%s2262 + $0x54] sm:%s2255]
                %2307 = vst [vmem:[%s2263 + $0xd4] sm:%s2255] %v2306
                %v2308 = vld [vmem:[%s2262 + $0x58] sm:%s2255]
                %2309 = vst [vmem:[%s2263 + $0xd8] sm:%s2255] %v2308
                %v2310 = vld [vmem:[%s2262 + $0x5c] sm:%s2255]
                %2311 = vst [vmem:[%s2263 + $0xdc] sm:%s2255] %v2310
                %v2312 = vld [vmem:[%s2262 + $0x60] sm:%s2255]
                %2313 = vst [vmem:[%s2263 + $0xe0] sm:%s2255] %v2312
                %v2314 = vld [vmem:[%s2262 + $0x64] sm:%s2255]
                %2315 = vst [vmem:[%s2263 + $0xe4] sm:%s2255] %v2314
                %v2316 = vld [vmem:[%s2262 + $0x68] sm:%s2255]
                %2317 = vst [vmem:[%s2263 + $0xe8] sm:%s2255] %v2316
                %v2318 = vld [vmem:[%s2262 + $0x6c] sm:%s2255]
                %2319 = vst [vmem:[%s2263 + $0xec] sm:%s2255] %v2318
                %v2320 = vld [vmem:[%s2262 + $0x70] sm:%s2255]
                %2321 = vst [vmem:[%s2263 + $0xf0] sm:%s2255] %v2320
                %v2322 = vld [vmem:[%s2262 + $0x74] sm:%s2255]
                %2323 = vst [vmem:[%s2263 + $0xf4] sm:%s2255] %v2322
                %v2324 = vld [vmem:[%s2262 + $0x78] sm:%s2255]
                %2325 = vst [vmem:[%s2263 + $0xf8] sm:%s2255] %v2324
                %v2326 = vld [vmem:[%s2262 + $0x7c] sm:%s2255]
                %2327 = vst [vmem:[%s2263 + $0xfc] sm:%s2255] %v2326
              $region65: #{tpu_custom_call.1} parent=59 // loop_footer
                %s2261 = sadd.s32 1, %s2257
              $region66: #{tpu_custom_call.1} parent=59 // loop_footer_branch
                %2256 = sbr.rel target = $region62
              $region67: #{tpu_custom_call.1} parent=59 // loop_exit
                _
            $region60: #{tpu_custom_call.1} parent=51 // pred_fallthru
              _
          $region52: #{tpu_custom_call.1} parent=47 // pred_fallthru
            _
          %2412 = vnop
        $region48: #{tpu_custom_call.1} parent=35 // pred_fallthru
          _
      $region36: #{tpu_custom_call.1} parent=5 // pred_fallthru
        _
      %p2413 = scmp.le.s32.totalorder 2, %s16
      // Predicated region
      $region86: #{tpu_custom_call.1} parent=5 // pred_check
        %p2414 = pneg %p2413
      $region87: #{tpu_custom_call.1} parent=5 // pred_check_branch
        %2416 = sbr.rel (%p2414) target = $region89
      $region88: #{tpu_custom_call.1} parent=5 // pred_region
        %s2417 = ssub.s32 %s16, 2
        // Predicated region
        $region90: #{tpu_custom_call.1} parent=88 // pred_check
          %p2418 = pneg %p139
        $region91: #{tpu_custom_call.1} parent=88 // pred_check_branch
          %2420 = sbr.rel (%p2418) target = $region93
        $region92: #{tpu_custom_call.1} parent=88 // pred_region
          %s2421 = sand.u32 %s124, 1
          %s2422 = sand.u32 %s124, 1
          %s2423 = smul.addr %s2422, 128
          %s2424 = scalar_lea.vmem [#allocation6], %s2423
        $region93: #{tpu_custom_call.1} parent=88 // pred_fallthru
          _
      $region89: #{tpu_custom_call.1} parent=5 // pred_fallthru
        _
    $region6: #{tpu_custom_call.1} parent=1 // loop_footer
      %s20 = sadd.s32 1, %s16
    $region7: #{tpu_custom_call.1} parent=1 // loop_footer_branch
      %15 = sbr.rel target = $region3
    $region8: #{tpu_custom_call.1} parent=1 // loop_exit
      _
    %2425 = vsyncpa [#allocation3], 1
    %s2426 = scalar_lea.sflag [#allocation3], 1
    %2427 = vsyncpa %s2426, 1
    %2428 = vsyncpa [#allocation5], 1
    %s2429 = scalar_lea.sflag [#allocation5], 1
    %2430 = vsyncpa %s2429, 1

</llo_original>
